<compile_context>
chip_gen: v5e
topology: v5e:2x2
jax: 0.10.0
libtpu: 0.0.40
codegen_flags: <defaults>
</compile_context>

<pallas_src>
import jax
import jax.numpy as jnp
from jax import lax
from jax.experimental import pallas as pl
from jax.experimental.pallas import tpu as pltpu


def _lstm_last_hidden_kernel(x_ref, len_ref, wih_ref, whh_ref, b_ref,
                             o_ref, zx_ref):
    """LSTM recurrence with hoisted input projection.

    x_ref  : [T*Bp, D]    f32   time-major, batch padded to Bp
    len_ref: [Bp, 1]      i32   per-sequence valid length (0 for pad rows)
    wih_ref: [D,  4*Hp]   f32   W_ih^T, gate-padded (i,f,g,o in 128-lane blocks)
    whh_ref: [Hp, 4*Hp]   f32   W_hh^T, row- and gate-padded
    b_ref  : [1,  4*Hp]   f32   b_ih + b_hh, gate-padded
    o_ref  : [Bp, Hp]     f32   ht[-1] (padded; wrapper slices [:B, :H])
    zx_ref : [T*Bp, 4*Hp] f32   VMEM scratch for the hoisted projection
    """
    TBp, _ = x_ref.shape
    Bp, Hp = o_ref.shape
    T = TBp // Bp

    # --- One-shot input projection (+ bias folded in) for every timestep. ---
    zx_ref[...] = (
        jnp.dot(x_ref[...], wih_ref[...], preferred_element_type=jnp.float32)
        + b_ref[...])

    lens = len_ref[...]                       # [Bp, 1] int32

    h = jnp.zeros((Bp, Hp), jnp.float32)
    c = jnp.zeros((Bp, Hp), jnp.float32)
    out = jnp.zeros((Bp, Hp), jnp.float32)

    # T is a small static constant -> fully unrolled recurrence.
    for t in range(T):
        # Static, tile-aligned slice of the precomputed projection.
        z = zx_ref[t * Bp:(t + 1) * Bp, :] + jnp.dot(
            h, whh_ref[...], preferred_element_type=jnp.float32)   # [Bp, 4Hp]

        # Gate slices are lane-128 aligned (Hp == 128 * k).
        i_g = jax.nn.sigmoid(z[:, 0 * Hp:1 * Hp])
        f_g = jax.nn.sigmoid(z[:, 1 * Hp:2 * Hp])
        g_g = jnp.tanh(z[:, 2 * Hp:3 * Hp])
        o_g = jax.nn.sigmoid(z[:, 3 * Hp:4 * Hp])

        c = f_g * c + i_g * g_g
        h = o_g * jnp.tanh(c)

        # Capture the hidden state at each sequence's last valid step.
        # (Off the recurrent chain: `out` never feeds the next matmul.)
        out = jnp.where(lens == (t + 1), h, out)

    o_ref[...] = out


def text_summary_forward(inputs, input_lengths, w_ih, w_hh, b_ih, b_hh):
    """inputs: [B, T, D] f32, input_lengths: [B] int -> [B, H] f32 (= ht[-1])."""
    B, T, D = inputs.shape
    H = w_hh.shape[1]

    Bp = ((B + 7) // 8) * 8            # fill f32 sublanes
    Hp = ((H + 127) // 128) * 128      # lane-align each gate block

    # --- Inputs: time-major, batch padded, flattened to a 2-D matmul LHS. ---
    x_tm = jnp.transpose(inputs, (1, 0, 2)).astype(jnp.float32)     # [T, B, D]
    x_tm = jnp.pad(x_tm, ((0, 0), (0, Bp - B), (0, 0)))             # [T, Bp, D]
    x2d = x_tm.reshape(T * Bp, D)                                   # [T*Bp, D]

    lens = jnp.pad(input_lengths.astype(jnp.int32), (0, Bp - B)).reshape(Bp, 1)

    # --- Weights: transpose, split gates, pad each gate to Hp lanes. ---
    wih_t = jnp.transpose(w_ih).astype(jnp.float32)                 # [D, 4H]
    wih_p = jnp.pad(wih_t.reshape(D, 4, H),
                    ((0, 0), (0, 0), (0, Hp - H))).reshape(D, 4 * Hp)

    whh_t = jnp.transpose(w_hh).astype(jnp.float32)                 # [H, 4H]
    whh_p = jnp.pad(whh_t.reshape(H, 4, H),
                    ((0, Hp - H), (0, 0), (0, Hp - H))).reshape(Hp, 4 * Hp)

    bias = (b_ih + b_hh).astype(jnp.float32).reshape(4, H)
    bias_p = jnp.pad(bias, ((0, 0), (0, Hp - H))).reshape(1, 4 * Hp)

    out_p = pl.pallas_call(
        _lstm_last_hidden_kernel,
        out_shape=jax.ShapeDtypeStruct((Bp, Hp), jnp.float32),
        in_specs=[pl.BlockSpec(memory_space=pltpu.MemorySpace.VMEM)] * 5,
        out_specs=pl.BlockSpec(memory_space=pltpu.MemorySpace.VMEM),
        scratch_shapes=[pltpu.VMEM((T * Bp, 4 * Hp), jnp.float32)],
    )(x2d, lens, wih_p, whh_p, bias_p)

    return out_p[:B, :H]


def _reference_forward(inputs, input_lengths, w_ih, w_hh, b_ih, b_hh):
    """Pure-JAX reference with the same packed-LSTM (freeze) semantics."""
    B, T, D = inputs.shape
    H = w_hh.shape[1]
    bias = b_ih + b_hh

    def step(carry, xs):
        h, c = carry
        x_t, t = xs
        z = x_t @ w_ih.T + h @ w_hh.T + bias
        i_g = jax.nn.sigmoid(z[:, 0 * H:1 * H])
        f_g = jax.nn.sigmoid(z[:, 1 * H:2 * H])
        g_g = jnp.tanh(z[:, 2 * H:3 * H])
        o_g = jax.nn.sigmoid(z[:, 3 * H:4 * H])
        c_new = f_g * c + i_g * g_g
        h_new = o_g * jnp.tanh(c_new)
        valid = (t < input_lengths)[:, None]
        return (jnp.where(valid, h_new, h), jnp.where(valid, c_new, c)), None

    x_tm = jnp.transpose(inputs, (1, 0, 2))
    (h, _), _ = lax.scan(step, (jnp.zeros((B, H)), jnp.zeros((B, H))),
                         (x_tm, jnp.arange(T)))
    return h


if __name__ == "__main__":
    # Module hyperparameters (small, consistent with the forward):
    #   encoder_output_dim (LSTM input size)  = 16
    #   embedding_dim      (LSTM hidden size) = 32
    B, T = 2, 8
    D_in, H = 16, 32

    key = jax.random.PRNGKey(0)
    k1, k2, k3, k4, k5, _ = jax.random.split(key, 6)

    # PyTorch-style uniform(-1/sqrt(H), 1/sqrt(H)) init, gate order i,f,g,o.
    bound = 1.0 / jnp.sqrt(jnp.float32(H))
    w_ih = jax.random.uniform(k1, (4 * H, D_in), jnp.float32, -bound, bound)
    w_hh = jax.random.uniform(k2, (4 * H, H), jnp.float32, -bound, bound)
    b_ih = jax.random.uniform(k3, (4 * H,), jnp.float32, -bound, bound)
    b_hh = jax.random.uniform(k4, (4 * H,), jnp.float32, -bound, bound)

    inputs = jax.random.normal(k5, (B, T, D_in), jnp.float32)
    input_lengths = jnp.array([8, 5], dtype=jnp.int32)   # variable lengths

    out = text_summary_forward(inputs, input_lengths, w_ih, w_hh, b_ih, b_hh)
    out = jax.block_until_ready(out)

    ref = _reference_forward(inputs, input_lengths, w_ih, w_hh, b_ih, b_hh)
    assert out.shape == (B, H)
    assert jnp.allclose(out, ref, atol=1e-5, rtol=1e-5), "mismatch vs reference"

    print("KERNEL_OK")
</pallas_src>

<mosaic_0001>
module attributes {stable_mosaic.version = 11 : i64} {
  func.func @_lstm_last_hidden_kernel(%arg0: memref<64x16xf32, #tpu.memory_space<vmem>>, %arg1: memref<8x1xi32, #tpu.memory_space<vmem>>, %arg2: memref<16x512xf32, #tpu.memory_space<vmem>>, %arg3: memref<128x512xf32, #tpu.memory_space<vmem>>, %arg4: memref<1x512xf32, #tpu.memory_space<vmem>>, %arg5: memref<8x128xf32, #tpu.memory_space<vmem>>, %arg6: memref<64x512xf32, #tpu.memory_space<vmem>>) attributes {dimension_semantics = [], scalar_prefetch = 0 : i64, scratch_operands = 1 : i64, tpu.core_type = #tpu.core_type<tc>} {
    %c0 = arith.constant 0 : index
    %c0_0 = arith.constant 0 : index
    %0 = vector.load %arg0[%c0, %c0_0] : memref<64x16xf32, #tpu.memory_space<vmem>>, vector<64x16xf32>
    %c0_1 = arith.constant 0 : index
    %c0_2 = arith.constant 0 : index
    %1 = vector.load %arg2[%c0_1, %c0_2] : memref<16x512xf32, #tpu.memory_space<vmem>>, vector<16x512xf32>
    %cst = arith.constant dense<0.000000e+00> : vector<64x512xf32>
    %2 = tpu.matmul %0, %1, %cst {dimension_numbers = #tpu.dot_dimension_numbers<[1], [0], [0], [1], [0, 0, 1, 1], [], []>} : vector<64x16xf32>, vector<16x512xf32>, vector<64x512xf32> -> vector<64x512xf32>
    %c0_3 = arith.constant 0 : index
    %c0_4 = arith.constant 0 : index
    %3 = vector.load %arg4[%c0_3, %c0_4] : memref<1x512xf32, #tpu.memory_space<vmem>>, vector<1x512xf32>
    %4 = vector.broadcast %3 : vector<1x512xf32> to vector<64x512xf32>
    %5 = arith.addf %2, %4 : vector<64x512xf32>
    %c0_5 = arith.constant 0 : index
    %c0_6 = arith.constant 0 : index
    %6 = vector.load %arg6[%c0_5, %c0_6] : memref<64x512xf32, #tpu.memory_space<vmem>>, vector<64x512xf32>
    tpu.vector_store %arg6[%c0_5, %c0_6], %5 {strides = array<i32>} : memref<64x512xf32, #tpu.memory_space<vmem>>, vector<64x512xf32>,
    %c0_7 = arith.constant 0 : index
    %c0_8 = arith.constant 0 : index
    %7 = vector.load %arg1[%c0_7, %c0_8] : memref<8x1xi32, #tpu.memory_space<vmem>>, vector<8x1xi32>
    %cst_9 = arith.constant 0.000000e+00 : f32
    %8 = vector.broadcast %cst_9 : f32 to vector<8x128xf32>
    %cst_10 = arith.constant 0.000000e+00 : f32
    %9 = vector.broadcast %cst_10 : f32 to vector<8x128xf32>
    %cst_11 = arith.constant 0.000000e+00 : f32
    %10 = vector.broadcast %cst_11 : f32 to vector<8x128xf32>
    %c0_12 = arith.constant 0 : index
    %c0_13 = arith.constant 0 : index
    %11 = vector.load %arg6[%c0_12, %c0_13] : memref<64x512xf32, #tpu.memory_space<vmem>>, vector<8x512xf32>
    %c0_14 = arith.constant 0 : index
    %c0_15 = arith.constant 0 : index
    %12 = vector.load %arg3[%c0_14, %c0_15] : memref<128x512xf32, #tpu.memory_space<vmem>>, vector<128x512xf32>
    %cst_16 = arith.constant dense<0.000000e+00> : vector<8x512xf32>
    %13 = tpu.matmul %8, %12, %cst_16 {dimension_numbers = #tpu.dot_dimension_numbers<[1], [0], [0], [1], [0, 0, 1, 1], [], []>} : vector<8x128xf32>, vector<128x512xf32>, vector<8x512xf32> -> vector<8x512xf32>
    %14 = arith.addf %11, %13 : vector<8x512xf32>
    %15 = vector.extract_strided_slice %14 {offsets = [0, 0], sizes = [8, 128], strides = [1, 1]} : vector<8x512xf32> to vector<8x128xf32>
    %16 = arith.negf %15 : vector<8x128xf32>
    %17 = math.exp %16 : vector<8x128xf32>
    %cst_17 = arith.constant 1.000000e+00 : f32
    %18 = vector.broadcast %cst_17 : f32 to vector<8x128xf32>
    %19 = arith.addf %18, %17 : vector<8x128xf32>
    %20 = arith.divf %18, %19 : vector<8x128xf32>
    %21 = vector.extract_strided_slice %14 {offsets = [0, 128], sizes = [8, 128], strides = [1, 1]} : vector<8x512xf32> to vector<8x128xf32>
    %22 = arith.negf %21 : vector<8x128xf32>
    %23 = math.exp %22 : vector<8x128xf32>
    %cst_18 = arith.constant 1.000000e+00 : f32
    %24 = vector.broadcast %cst_18 : f32 to vector<8x128xf32>
    %25 = arith.addf %24, %23 : vector<8x128xf32>
    %26 = arith.divf %24, %25 : vector<8x128xf32>
    %27 = vector.extract_strided_slice %14 {offsets = [0, 256], sizes = [8, 128], strides = [1, 1]} : vector<8x512xf32> to vector<8x128xf32>
    %28 = math.tanh %27 : vector<8x128xf32>
    %29 = vector.extract_strided_slice %14 {offsets = [0, 384], sizes = [8, 128], strides = [1, 1]} : vector<8x512xf32> to vector<8x128xf32>
    %30 = arith.negf %29 : vector<8x128xf32>
    %31 = math.exp %30 : vector<8x128xf32>
    %cst_19 = arith.constant 1.000000e+00 : f32
    %32 = vector.broadcast %cst_19 : f32 to vector<8x128xf32>
    %33 = arith.addf %32, %31 : vector<8x128xf32>
    %34 = arith.divf %32, %33 : vector<8x128xf32>
    %35 = arith.mulf %26, %9 : vector<8x128xf32>
    %36 = arith.mulf %20, %28 : vector<8x128xf32>
    %37 = arith.addf %35, %36 : vector<8x128xf32>
    %38 = math.tanh %37 : vector<8x128xf32>
    %39 = arith.mulf %34, %38 : vector<8x128xf32>
    %c1_i32 = arith.constant 1 : i32
    %40 = vector.broadcast %c1_i32 : i32 to vector<8x1xi32>
    %41 = arith.cmpi eq, %7, %40 : vector<8x1xi32>
    %42 = vector.shape_cast %41 : vector<8x1xi1> to vector<8x1xi1>
    %43 = vector.broadcast %42 : vector<8x1xi1> to vector<8x128xi1>
    %44 = arith.select %43, %39, %10 : vector<8x128xi1>, vector<8x128xf32>
    %c8 = arith.constant 8 : index
    %c0_20 = arith.constant 0 : index
    %45 = vector.load %arg6[%c8, %c0_20] : memref<64x512xf32, #tpu.memory_space<vmem>>, vector<8x512xf32>
    %c0_21 = arith.constant 0 : index
    %c0_22 = arith.constant 0 : index
    %46 = vector.load %arg3[%c0_21, %c0_22] : memref<128x512xf32, #tpu.memory_space<vmem>>, vector<128x512xf32>
    %cst_23 = arith.constant dense<0.000000e+00> : vector<8x512xf32>
    %47 = tpu.matmul %39, %46, %cst_23 {dimension_numbers = #tpu.dot_dimension_numbers<[1], [0], [0], [1], [0, 0, 1, 1], [], []>} : vector<8x128xf32>, vector<128x512xf32>, vector<8x512xf32> -> vector<8x512xf32>
    %48 = arith.addf %45, %47 : vector<8x512xf32>
    %49 = vector.extract_strided_slice %48 {offsets = [0, 0], sizes = [8, 128], strides = [1, 1]} : vector<8x512xf32> to vector<8x128xf32>
    %50 = arith.negf %49 : vector<8x128xf32>
    %51 = math.exp %50 : vector<8x128xf32>
    %cst_24 = arith.constant 1.000000e+00 : f32
    %52 = vector.broadcast %cst_24 : f32 to vector<8x128xf32>
    %53 = arith.addf %52, %51 : vector<8x128xf32>
    %54 = arith.divf %52, %53 : vector<8x128xf32>
    %55 = vector.extract_strided_slice %48 {offsets = [0, 128], sizes = [8, 128], strides = [1, 1]} : vector<8x512xf32> to vector<8x128xf32>
    %56 = arith.negf %55 : vector<8x128xf32>
    %57 = math.exp %56 : vector<8x128xf32>
    %cst_25 = arith.constant 1.000000e+00 : f32
    %58 = vector.broadcast %cst_25 : f32 to vector<8x128xf32>
    %59 = arith.addf %58, %57 : vector<8x128xf32>
    %60 = arith.divf %58, %59 : vector<8x128xf32>
    %61 = vector.extract_strided_slice %48 {offsets = [0, 256], sizes = [8, 128], strides = [1, 1]} : vector<8x512xf32> to vector<8x128xf32>
    %62 = math.tanh %61 : vector<8x128xf32>
    %63 = vector.extract_strided_slice %48 {offsets = [0, 384], sizes = [8, 128], strides = [1, 1]} : vector<8x512xf32> to vector<8x128xf32>
    %64 = arith.negf %63 : vector<8x128xf32>
    %65 = math.exp %64 : vector<8x128xf32>
    %cst_26 = arith.constant 1.000000e+00 : f32
    %66 = vector.broadcast %cst_26 : f32 to vector<8x128xf32>
    %67 = arith.addf %66, %65 : vector<8x128xf32>
    %68 = arith.divf %66, %67 : vector<8x128xf32>
    %69 = arith.mulf %60, %37 : vector<8x128xf32>
    %70 = arith.mulf %54, %62 : vector<8x128xf32>
    %71 = arith.addf %69, %70 : vector<8x128xf32>
    %72 = math.tanh %71 : vector<8x128xf32>
    %73 = arith.mulf %68, %72 : vector<8x128xf32>
    %c2_i32 = arith.constant 2 : i32
    %74 = vector.broadcast %c2_i32 : i32 to vector<8x1xi32>
    %75 = arith.cmpi eq, %7, %74 : vector<8x1xi32>
    %76 = vector.shape_cast %75 : vector<8x1xi1> to vector<8x1xi1>
    %77 = vector.broadcast %76 : vector<8x1xi1> to vector<8x128xi1>
    %78 = arith.select %77, %73, %44 : vector<8x128xi1>, vector<8x128xf32>
    %c16 = arith.constant 16 : index
    %c0_27 = arith.constant 0 : index
    %79 = vector.load %arg6[%c16, %c0_27] : memref<64x512xf32, #tpu.memory_space<vmem>>, vector<8x512xf32>
    %c0_28 = arith.constant 0 : index
    %c0_29 = arith.constant 0 : index
    %80 = vector.load %arg3[%c0_28, %c0_29] : memref<128x512xf32, #tpu.memory_space<vmem>>, vector<128x512xf32>
    %cst_30 = arith.constant dense<0.000000e+00> : vector<8x512xf32>
    %81 = tpu.matmul %73, %80, %cst_30 {dimension_numbers = #tpu.dot_dimension_numbers<[1], [0], [0], [1], [0, 0, 1, 1], [], []>} : vector<8x128xf32>, vector<128x512xf32>, vector<8x512xf32> -> vector<8x512xf32>
    %82 = arith.addf %79, %81 : vector<8x512xf32>
    %83 = vector.extract_strided_slice %82 {offsets = [0, 0], sizes = [8, 128], strides = [1, 1]} : vector<8x512xf32> to vector<8x128xf32>
    %84 = arith.negf %83 : vector<8x128xf32>
    %85 = math.exp %84 : vector<8x128xf32>
    %cst_31 = arith.constant 1.000000e+00 : f32
    %86 = vector.broadcast %cst_31 : f32 to vector<8x128xf32>
    %87 = arith.addf %86, %85 : vector<8x128xf32>
    %88 = arith.divf %86, %87 : vector<8x128xf32>
    %89 = vector.extract_strided_slice %82 {offsets = [0, 128], sizes = [8, 128], strides = [1, 1]} : vector<8x512xf32> to vector<8x128xf32>
    %90 = arith.negf %89 : vector<8x128xf32>
    %91 = math.exp %90 : vector<8x128xf32>
    %cst_32 = arith.constant 1.000000e+00 : f32
    %92 = vector.broadcast %cst_32 : f32 to vector<8x128xf32>
    %93 = arith.addf %92, %91 : vector<8x128xf32>
    %94 = arith.divf %92, %93 : vector<8x128xf32>
    %95 = vector.extract_strided_slice %82 {offsets = [0, 256], sizes = [8, 128], strides = [1, 1]} : vector<8x512xf32> to vector<8x128xf32>
    %96 = math.tanh %95 : vector<8x128xf32>
    %97 = vector.extract_strided_slice %82 {offsets = [0, 384], sizes = [8, 128], strides = [1, 1]} : vector<8x512xf32> to vector<8x128xf32>
    %98 = arith.negf %97 : vector<8x128xf32>
    %99 = math.exp %98 : vector<8x128xf32>
    %cst_33 = arith.constant 1.000000e+00 : f32
    %100 = vector.broadcast %cst_33 : f32 to vector<8x128xf32>
    %101 = arith.addf %100, %99 : vector<8x128xf32>
    %102 = arith.divf %100, %101 : vector<8x128xf32>
    %103 = arith.mulf %94, %71 : vector<8x128xf32>
    %104 = arith.mulf %88, %96 : vector<8x128xf32>
    %105 = arith.addf %103, %104 : vector<8x128xf32>
    %106 = math.tanh %105 : vector<8x128xf32>
    %107 = arith.mulf %102, %106 : vector<8x128xf32>
    %c3_i32 = arith.constant 3 : i32
    %108 = vector.broadcast %c3_i32 : i32 to vector<8x1xi32>
    %109 = arith.cmpi eq, %7, %108 : vector<8x1xi32>
    %110 = vector.shape_cast %109 : vector<8x1xi1> to vector<8x1xi1>
    %111 = vector.broadcast %110 : vector<8x1xi1> to vector<8x128xi1>
    %112 = arith.select %111, %107, %78 : vector<8x128xi1>, vector<8x128xf32>
    %c24 = arith.constant 24 : index
    %c0_34 = arith.constant 0 : index
    %113 = vector.load %arg6[%c24, %c0_34] : memref<64x512xf32, #tpu.memory_space<vmem>>, vector<8x512xf32>
    %c0_35 = arith.constant 0 : index
    %c0_36 = arith.constant 0 : index
    %114 = vector.load %arg3[%c0_35, %c0_36] : memref<128x512xf32, #tpu.memory_space<vmem>>, vector<128x512xf32>
    %cst_37 = arith.constant dense<0.000000e+00> : vector<8x512xf32>
    %115 = tpu.matmul %107, %114, %cst_37 {dimension_numbers = #tpu.dot_dimension_numbers<[1], [0], [0], [1], [0, 0, 1, 1], [], []>} : vector<8x128xf32>, vector<128x512xf32>, vector<8x512xf32> -> vector<8x512xf32>
    %116 = arith.addf %113, %115 : vector<8x512xf32>
    %117 = vector.extract_strided_slice %116 {offsets = [0, 0], sizes = [8, 128], strides = [1, 1]} : vector<8x512xf32> to vector<8x128xf32>
    %118 = arith.negf %117 : vector<8x128xf32>
    %119 = math.exp %118 : vector<8x128xf32>
    %cst_38 = arith.constant 1.000000e+00 : f32
    %120 = vector.broadcast %cst_38 : f32 to vector<8x128xf32>
    %121 = arith.addf %120, %119 : vector<8x128xf32>
    %122 = arith.divf %120, %121 : vector<8x128xf32>
    %123 = vector.extract_strided_slice %116 {offsets = [0, 128], sizes = [8, 128], strides = [1, 1]} : vector<8x512xf32> to vector<8x128xf32>
    %124 = arith.negf %123 : vector<8x128xf32>
    %125 = math.exp %124 : vector<8x128xf32>
    %cst_39 = arith.constant 1.000000e+00 : f32
    %126 = vector.broadcast %cst_39 : f32 to vector<8x128xf32>
    %127 = arith.addf %126, %125 : vector<8x128xf32>
    %128 = arith.divf %126, %127 : vector<8x128xf32>
    %129 = vector.extract_strided_slice %116 {offsets = [0, 256], sizes = [8, 128], strides = [1, 1]} : vector<8x512xf32> to vector<8x128xf32>
    %130 = math.tanh %129 : vector<8x128xf32>
    %131 = vector.extract_strided_slice %116 {offsets = [0, 384], sizes = [8, 128], strides = [1, 1]} : vector<8x512xf32> to vector<8x128xf32>
    %132 = arith.negf %131 : vector<8x128xf32>
    %133 = math.exp %132 : vector<8x128xf32>
    %cst_40 = arith.constant 1.000000e+00 : f32
    %134 = vector.broadcast %cst_40 : f32 to vector<8x128xf32>
    %135 = arith.addf %134, %133 : vector<8x128xf32>
    %136 = arith.divf %134, %135 : vector<8x128xf32>
    %137 = arith.mulf %128, %105 : vector<8x128xf32>
    %138 = arith.mulf %122, %130 : vector<8x128xf32>
    %139 = arith.addf %137, %138 : vector<8x128xf32>
    %140 = math.tanh %139 : vector<8x128xf32>
    %141 = arith.mulf %136, %140 : vector<8x128xf32>
    %c4_i32 = arith.constant 4 : i32
    %142 = vector.broadcast %c4_i32 : i32 to vector<8x1xi32>
    %143 = arith.cmpi eq, %7, %142 : vector<8x1xi32>
    %144 = vector.shape_cast %143 : vector<8x1xi1> to vector<8x1xi1>
    %145 = vector.broadcast %144 : vector<8x1xi1> to vector<8x128xi1>
    %146 = arith.select %145, %141, %112 : vector<8x128xi1>, vector<8x128xf32>
    %c32 = arith.constant 32 : index
    %c0_41 = arith.constant 0 : index
    %147 = vector.load %arg6[%c32, %c0_41] : memref<64x512xf32, #tpu.memory_space<vmem>>, vector<8x512xf32>
    %c0_42 = arith.constant 0 : index
    %c0_43 = arith.constant 0 : index
    %148 = vector.load %arg3[%c0_42, %c0_43] : memref<128x512xf32, #tpu.memory_space<vmem>>, vector<128x512xf32>
    %cst_44 = arith.constant dense<0.000000e+00> : vector<8x512xf32>
    %149 = tpu.matmul %141, %148, %cst_44 {dimension_numbers = #tpu.dot_dimension_numbers<[1], [0], [0], [1], [0, 0, 1, 1], [], []>} : vector<8x128xf32>, vector<128x512xf32>, vector<8x512xf32> -> vector<8x512xf32>
    %150 = arith.addf %147, %149 : vector<8x512xf32>
    %151 = vector.extract_strided_slice %150 {offsets = [0, 0], sizes = [8, 128], strides = [1, 1]} : vector<8x512xf32> to vector<8x128xf32>
    %152 = arith.negf %151 : vector<8x128xf32>
    %153 = math.exp %152 : vector<8x128xf32>
    %cst_45 = arith.constant 1.000000e+00 : f32
    %154 = vector.broadcast %cst_45 : f32 to vector<8x128xf32>
    %155 = arith.addf %154, %153 : vector<8x128xf32>
    %156 = arith.divf %154, %155 : vector<8x128xf32>
    %157 = vector.extract_strided_slice %150 {offsets = [0, 128], sizes = [8, 128], strides = [1, 1]} : vector<8x512xf32> to vector<8x128xf32>
    %158 = arith.negf %157 : vector<8x128xf32>
    %159 = math.exp %158 : vector<8x128xf32>
    %cst_46 = arith.constant 1.000000e+00 : f32
    %160 = vector.broadcast %cst_46 : f32 to vector<8x128xf32>
    %161 = arith.addf %160, %159 : vector<8x128xf32>
    %162 = arith.divf %160, %161 : vector<8x128xf32>
    %163 = vector.extract_strided_slice %150 {offsets = [0, 256], sizes = [8, 128], strides = [1, 1]} : vector<8x512xf32> to vector<8x128xf32>
    %164 = math.tanh %163 : vector<8x128xf32>
    %165 = vector.extract_strided_slice %150 {offsets = [0, 384], sizes = [8, 128], strides = [1, 1]} : vector<8x512xf32> to vector<8x128xf32>
    %166 = arith.negf %165 : vector<8x128xf32>
    %167 = math.exp %166 : vector<8x128xf32>
    %cst_47 = arith.constant 1.000000e+00 : f32
    %168 = vector.broadcast %cst_47 : f32 to vector<8x128xf32>
    %169 = arith.addf %168, %167 : vector<8x128xf32>
    %170 = arith.divf %168, %169 : vector<8x128xf32>
    %171 = arith.mulf %162, %139 : vector<8x128xf32>
    %172 = arith.mulf %156, %164 : vector<8x128xf32>
    %173 = arith.addf %171, %172 : vector<8x128xf32>
    %174 = math.tanh %173 : vector<8x128xf32>
    %175 = arith.mulf %170, %174 : vector<8x128xf32>
    %c5_i32 = arith.constant 5 : i32
    %176 = vector.broadcast %c5_i32 : i32 to vector<8x1xi32>
    %177 = arith.cmpi eq, %7, %176 : vector<8x1xi32>
    %178 = vector.shape_cast %177 : vector<8x1xi1> to vector<8x1xi1>
    %179 = vector.broadcast %178 : vector<8x1xi1> to vector<8x128xi1>
    %180 = arith.select %179, %175, %146 : vector<8x128xi1>, vector<8x128xf32>
    %c40 = arith.constant 40 : index
    %c0_48 = arith.constant 0 : index
    %181 = vector.load %arg6[%c40, %c0_48] : memref<64x512xf32, #tpu.memory_space<vmem>>, vector<8x512xf32>
    %c0_49 = arith.constant 0 : index
    %c0_50 = arith.constant 0 : index
    %182 = vector.load %arg3[%c0_49, %c0_50] : memref<128x512xf32, #tpu.memory_space<vmem>>, vector<128x512xf32>
    %cst_51 = arith.constant dense<0.000000e+00> : vector<8x512xf32>
    %183 = tpu.matmul %175, %182, %cst_51 {dimension_numbers = #tpu.dot_dimension_numbers<[1], [0], [0], [1], [0, 0, 1, 1], [], []>} : vector<8x128xf32>, vector<128x512xf32>, vector<8x512xf32> -> vector<8x512xf32>
    %184 = arith.addf %181, %183 : vector<8x512xf32>
    %185 = vector.extract_strided_slice %184 {offsets = [0, 0], sizes = [8, 128], strides = [1, 1]} : vector<8x512xf32> to vector<8x128xf32>
    %186 = arith.negf %185 : vector<8x128xf32>
    %187 = math.exp %186 : vector<8x128xf32>
    %cst_52 = arith.constant 1.000000e+00 : f32
    %188 = vector.broadcast %cst_52 : f32 to vector<8x128xf32>
    %189 = arith.addf %188, %187 : vector<8x128xf32>
    %190 = arith.divf %188, %189 : vector<8x128xf32>
    %191 = vector.extract_strided_slice %184 {offsets = [0, 128], sizes = [8, 128], strides = [1, 1]} : vector<8x512xf32> to vector<8x128xf32>
    %192 = arith.negf %191 : vector<8x128xf32>
    %193 = math.exp %192 : vector<8x128xf32>
    %cst_53 = arith.constant 1.000000e+00 : f32
    %194 = vector.broadcast %cst_53 : f32 to vector<8x128xf32>
    %195 = arith.addf %194, %193 : vector<8x128xf32>
    %196 = arith.divf %194, %195 : vector<8x128xf32>
    %197 = vector.extract_strided_slice %184 {offsets = [0, 256], sizes = [8, 128], strides = [1, 1]} : vector<8x512xf32> to vector<8x128xf32>
    %198 = math.tanh %197 : vector<8x128xf32>
    %199 = vector.extract_strided_slice %184 {offsets = [0, 384], sizes = [8, 128], strides = [1, 1]} : vector<8x512xf32> to vector<8x128xf32>
    %200 = arith.negf %199 : vector<8x128xf32>
    %201 = math.exp %200 : vector<8x128xf32>
    %cst_54 = arith.constant 1.000000e+00 : f32
    %202 = vector.broadcast %cst_54 : f32 to vector<8x128xf32>
    %203 = arith.addf %202, %201 : vector<8x128xf32>
    %204 = arith.divf %202, %203 : vector<8x128xf32>
    %205 = arith.mulf %196, %173 : vector<8x128xf32>
    %206 = arith.mulf %190, %198 : vector<8x128xf32>
    %207 = arith.addf %205, %206 : vector<8x128xf32>
    %208 = math.tanh %207 : vector<8x128xf32>
    %209 = arith.mulf %204, %208 : vector<8x128xf32>
    %c6_i32 = arith.constant 6 : i32
    %210 = vector.broadcast %c6_i32 : i32 to vector<8x1xi32>
    %211 = arith.cmpi eq, %7, %210 : vector<8x1xi32>
    %212 = vector.shape_cast %211 : vector<8x1xi1> to vector<8x1xi1>
    %213 = vector.broadcast %212 : vector<8x1xi1> to vector<8x128xi1>
    %214 = arith.select %213, %209, %180 : vector<8x128xi1>, vector<8x128xf32>
    %c48 = arith.constant 48 : index
    %c0_55 = arith.constant 0 : index
    %215 = vector.load %arg6[%c48, %c0_55] : memref<64x512xf32, #tpu.memory_space<vmem>>, vector<8x512xf32>
    %c0_56 = arith.constant 0 : index
    %c0_57 = arith.constant 0 : index
    %216 = vector.load %arg3[%c0_56, %c0_57] : memref<128x512xf32, #tpu.memory_space<vmem>>, vector<128x512xf32>
    %cst_58 = arith.constant dense<0.000000e+00> : vector<8x512xf32>
    %217 = tpu.matmul %209, %216, %cst_58 {dimension_numbers = #tpu.dot_dimension_numbers<[1], [0], [0], [1], [0, 0, 1, 1], [], []>} : vector<8x128xf32>, vector<128x512xf32>, vector<8x512xf32> -> vector<8x512xf32>
    %218 = arith.addf %215, %217 : vector<8x512xf32>
    %219 = vector.extract_strided_slice %218 {offsets = [0, 0], sizes = [8, 128], strides = [1, 1]} : vector<8x512xf32> to vector<8x128xf32>
    %220 = arith.negf %219 : vector<8x128xf32>
    %221 = math.exp %220 : vector<8x128xf32>
    %cst_59 = arith.constant 1.000000e+00 : f32
    %222 = vector.broadcast %cst_59 : f32 to vector<8x128xf32>
    %223 = arith.addf %222, %221 : vector<8x128xf32>
    %224 = arith.divf %222, %223 : vector<8x128xf32>
    %225 = vector.extract_strided_slice %218 {offsets = [0, 128], sizes = [8, 128], strides = [1, 1]} : vector<8x512xf32> to vector<8x128xf32>
    %226 = arith.negf %225 : vector<8x128xf32>
    %227 = math.exp %226 : vector<8x128xf32>
    %cst_60 = arith.constant 1.000000e+00 : f32
    %228 = vector.broadcast %cst_60 : f32 to vector<8x128xf32>
    %229 = arith.addf %228, %227 : vector<8x128xf32>
    %230 = arith.divf %228, %229 : vector<8x128xf32>
    %231 = vector.extract_strided_slice %218 {offsets = [0, 256], sizes = [8, 128], strides = [1, 1]} : vector<8x512xf32> to vector<8x128xf32>
    %232 = math.tanh %231 : vector<8x128xf32>
    %233 = vector.extract_strided_slice %218 {offsets = [0, 384], sizes = [8, 128], strides = [1, 1]} : vector<8x512xf32> to vector<8x128xf32>
    %234 = arith.negf %233 : vector<8x128xf32>
    %235 = math.exp %234 : vector<8x128xf32>
    %cst_61 = arith.constant 1.000000e+00 : f32
    %236 = vector.broadcast %cst_61 : f32 to vector<8x128xf32>
    %237 = arith.addf %236, %235 : vector<8x128xf32>
    %238 = arith.divf %236, %237 : vector<8x128xf32>
    %239 = arith.mulf %230, %207 : vector<8x128xf32>
    %240 = arith.mulf %224, %232 : vector<8x128xf32>
    %241 = arith.addf %239, %240 : vector<8x128xf32>
    %242 = math.tanh %241 : vector<8x128xf32>
    %243 = arith.mulf %238, %242 : vector<8x128xf32>
    %c7_i32 = arith.constant 7 : i32
    %244 = vector.broadcast %c7_i32 : i32 to vector<8x1xi32>
    %245 = arith.cmpi eq, %7, %244 : vector<8x1xi32>
    %246 = vector.shape_cast %245 : vector<8x1xi1> to vector<8x1xi1>
    %247 = vector.broadcast %246 : vector<8x1xi1> to vector<8x128xi1>
    %248 = arith.select %247, %243, %214 : vector<8x128xi1>, vector<8x128xf32>
    %c56 = arith.constant 56 : index
    %c0_62 = arith.constant 0 : index
    %249 = vector.load %arg6[%c56, %c0_62] : memref<64x512xf32, #tpu.memory_space<vmem>>, vector<8x512xf32>
    %c0_63 = arith.constant 0 : index
    %c0_64 = arith.constant 0 : index
    %250 = vector.load %arg3[%c0_63, %c0_64] : memref<128x512xf32, #tpu.memory_space<vmem>>, vector<128x512xf32>
    %cst_65 = arith.constant dense<0.000000e+00> : vector<8x512xf32>
    %251 = tpu.matmul %243, %250, %cst_65 {dimension_numbers = #tpu.dot_dimension_numbers<[1], [0], [0], [1], [0, 0, 1, 1], [], []>} : vector<8x128xf32>, vector<128x512xf32>, vector<8x512xf32> -> vector<8x512xf32>
    %252 = arith.addf %249, %251 : vector<8x512xf32>
    %253 = vector.extract_strided_slice %252 {offsets = [0, 0], sizes = [8, 128], strides = [1, 1]} : vector<8x512xf32> to vector<8x128xf32>
    %254 = arith.negf %253 : vector<8x128xf32>
    %255 = math.exp %254 : vector<8x128xf32>
    %cst_66 = arith.constant 1.000000e+00 : f32
    %256 = vector.broadcast %cst_66 : f32 to vector<8x128xf32>
    %257 = arith.addf %256, %255 : vector<8x128xf32>
    %258 = arith.divf %256, %257 : vector<8x128xf32>
    %259 = vector.extract_strided_slice %252 {offsets = [0, 128], sizes = [8, 128], strides = [1, 1]} : vector<8x512xf32> to vector<8x128xf32>
    %260 = arith.negf %259 : vector<8x128xf32>
    %261 = math.exp %260 : vector<8x128xf32>
    %cst_67 = arith.constant 1.000000e+00 : f32
    %262 = vector.broadcast %cst_67 : f32 to vector<8x128xf32>
    %263 = arith.addf %262, %261 : vector<8x128xf32>
    %264 = arith.divf %262, %263 : vector<8x128xf32>
    %265 = vector.extract_strided_slice %252 {offsets = [0, 256], sizes = [8, 128], strides = [1, 1]} : vector<8x512xf32> to vector<8x128xf32>
    %266 = math.tanh %265 : vector<8x128xf32>
    %267 = vector.extract_strided_slice %252 {offsets = [0, 384], sizes = [8, 128], strides = [1, 1]} : vector<8x512xf32> to vector<8x128xf32>
    %268 = arith.negf %267 : vector<8x128xf32>
    %269 = math.exp %268 : vector<8x128xf32>
    %cst_68 = arith.constant 1.000000e+00 : f32
    %270 = vector.broadcast %cst_68 : f32 to vector<8x128xf32>
    %271 = arith.addf %270, %269 : vector<8x128xf32>
    %272 = arith.divf %270, %271 : vector<8x128xf32>
    %273 = arith.mulf %264, %241 : vector<8x128xf32>
    %274 = arith.mulf %258, %266 : vector<8x128xf32>
    %275 = arith.addf %273, %274 : vector<8x128xf32>
    %276 = math.tanh %275 : vector<8x128xf32>
    %277 = arith.mulf %272, %276 : vector<8x128xf32>
    %c8_i32 = arith.constant 8 : i32
    %278 = vector.broadcast %c8_i32 : i32 to vector<8x1xi32>
    %279 = arith.cmpi eq, %7, %278 : vector<8x1xi32>
    %280 = vector.shape_cast %279 : vector<8x1xi1> to vector<8x1xi1>
    %281 = vector.broadcast %280 : vector<8x1xi1> to vector<8x128xi1>
    %282 = arith.select %281, %277, %248 : vector<8x128xi1>, vector<8x128xf32>
    %c0_69 = arith.constant 0 : index
    %c0_70 = arith.constant 0 : index
    %283 = vector.load %arg5[%c0_69, %c0_70] : memref<8x128xf32, #tpu.memory_space<vmem>>, vector<8x128xf32>
    tpu.vector_store %arg5[%c0_69, %c0_70], %282 {strides = array<i32>} : memref<8x128xf32, #tpu.memory_space<vmem>>, vector<8x128xf32>,
    return
  }
}

</mosaic_0001>

<llo_original>
// kernel: tpu_custom_call.1
$region0: #{tpu_custom_call.1}
  #allocation0 [shape = 'u32[]', space=smem, size = 0x4, offset = 0x4, fixed_abs, tag = 'smem constant byte address 0x4 - core index']
  #allocation1 [shape = 'u32[72,128]{1,0:T(1,128)}', space=vmem, size = 0x9000, scoped, tag = 'internal scratch']
  #allocation2 [shape = 'f32[64,512]{1,0:T(8,128)}', space=vmem, size = 0x20000, scoped, tag = 'scratch operand']
  %s0 = inlined_call_operand.vmem [shape: f32[64,16], index: 0, kind: input, shape index: {}]
  %s1 = inlined_call_operand.vmem [shape: s32[8,1], index: 1, kind: input, shape index: {}]
  %s2 = inlined_call_operand.vmem [shape: f32[16,512], index: 2, kind: input, shape index: {}]
  %s3 = inlined_call_operand.hbm [shape: f32[128,512], index: 3, kind: input, shape index: {}]
  %s4 = inlined_call_operand.vmem [shape: f32[1,512], index: 4, kind: input, shape index: {}]
  %s5 = inlined_call_operand.hbm [shape: f32[8,128], index: 5, kind: output, shape index: {}]
  %s6 = sld [smem:[#allocation0]]
  $region34: #{tpu_custom_call.1} parent=0
    _
  %s8 = ssub.s32 1, %s6
  %s9 = scalar_select 0, %s8, %s6
  $region1: #{tpu_custom_call.1} parent=0
    #allocation3 [shape = 'u8[262144]{0}', space=vmem, size = 0x40000, scoped, tag = 'input window, operand 3, single buffered']
    #allocation4 [shape = 's32[1]{0}', space=sflag, size = 0x4, scoped, tag = 'scoped memory for tpu_custom_call.1']
    #allocation5 [shape = 's32[1]{0}', space=sflag, size = 0x4, scoped, tag = 'scoped memory for tpu_custom_call.1']
    #allocation6 [shape = 'u8[4096]{0}', space=vmem, size = 0x1000, scoped, tag = 'output window, operand 0, single buffered']
    %10 = vsyncpa [#allocation4], 0
    %11 = vsyncpa [#allocation5], 0
    // Predicated region
    $region2: #{tpu_custom_call.1} parent=1 // pred_check
      _
    $region3: #{tpu_custom_call.1} parent=1 // pred_check_branch
      %13 = sbr.rel (0) target = $region5
    $region4: #{tpu_custom_call.1} parent=1 // pred_region
      _
    $region5: #{tpu_custom_call.1} parent=1 // pred_fallthru
      _
    // Predicated region
    $region6: #{tpu_custom_call.1} parent=1 // pred_check
      _
    $region7: #{tpu_custom_call.1} parent=1 // pred_check_branch
      %15 = sbr.rel (0) target = $region9
    $region8: #{tpu_custom_call.1} parent=1 // pred_region
      _
    $region9: #{tpu_custom_call.1} parent=1 // pred_fallthru
      _
    // Predicated region
    $region10: #{tpu_custom_call.1} parent=1 // pred_check
      _
    $region11: #{tpu_custom_call.1} parent=1 // pred_check_branch
      %17 = sbr.rel (0) target = $region13
    $region12: #{tpu_custom_call.1} parent=1 // pred_region
      _
    $region13: #{tpu_custom_call.1} parent=1 // pred_fallthru
      _
    // Predicated region
    $region14: #{tpu_custom_call.1} parent=1 // pred_check
      _
    $region15: #{tpu_custom_call.1} parent=1 // pred_check_branch
      %19 = sbr.rel (0) target = $region17
    $region16: #{tpu_custom_call.1} parent=1 // pred_region
      %21 = vsyncadd [#allocation4], 0
      %s22 = sshll.u32 %s3, 4
      %s23 = int_to_ptr.hbm [resolvable:$true] %s22
      %s24 = sshll.u32 [#allocation3], 4
      %s25 = int_to_ptr.vmem [resolvable:$true] %s24
      %30 = dma.hbm_to_vmem [thread:$0]  %s23, 8192, %s25, [#allocation4], 512, 512, 32
    $region17: #{tpu_custom_call.1} parent=1 // pred_fallthru
      _
    // Predicated region
    $region18: #{tpu_custom_call.1} parent=1 // pred_check
      _
    $region19: #{tpu_custom_call.1} parent=1 // pred_check_branch
      %32 = sbr.rel (0) target = $region21
    $region20: #{tpu_custom_call.1} parent=1 // pred_region
      _
    $region21: #{tpu_custom_call.1} parent=1 // pred_fallthru
      _
    // Predicated region
    $region22: #{tpu_custom_call.1} parent=1 // pred_check
      _
    $region23: #{tpu_custom_call.1} parent=1 // pred_check_branch
      %34 = sbr.rel (0) target = $region25
    $region24: #{tpu_custom_call.1} parent=1 // pred_region
      %36 = dma.done [#allocation4], 8192
    $region25: #{tpu_custom_call.1} parent=1 // pred_fallthru
      _
    %v37 = vld [vmem:[%s0] sm:$0xff]
    %v38 = vld [vmem:[%s0 + $0x8] sm:$0xff]
    %v39 = vld [vmem:[%s0 + $0x10] sm:$0xff]
    %v40 = vld [vmem:[%s0 + $0x18] sm:$0xff]
    %v41 = vld [vmem:[%s0 + $0x20] sm:$0xff]
    %v42 = vld [vmem:[%s0 + $0x28] sm:$0xff]
    %v43 = vld [vmem:[%s0 + $0x30] sm:$0xff]
    %v44 = vld [vmem:[%s0 + $0x38] sm:$0xff]
    %v45 = vld [vmem:[%s2] sm:$0xff]
    %v46 = vld [vmem:[%s2 + $0x8] sm:$0xff]
    %v47 = vld [vmem:[%s2 + $0x10] sm:$0xff]
    %v48 = vld [vmem:[%s2 + $0x18] sm:$0xff]
    %v49 = vld [vmem:[%s2 + $0x20] sm:$0xff]
    %v50 = vld [vmem:[%s2 + $0x28] sm:$0xff]
    %v51 = vld [vmem:[%s2 + $0x30] sm:$0xff]
    %v52 = vld [vmem:[%s2 + $0x38] sm:$0xff]
    %v53 = vld [vmem:[%s4] sm:$0xf]
    %v55 = vperm.slane %v53, 0
    %v56 = vperm.slane %v53, 1
    %v57 = vperm.slane %v53, 2
    %v58 = vperm.slane %v53, 3
    %vm63 = vcmask 130048
    %v65 = vsel %vm63, %v37, 0
    %v68 = vsel %vm63, %v38, 0
    %v71 = vsel %vm63, %v39, 0
    %v74 = vsel %vm63, %v40, 0
    %v77 = vsel %vm63, %v41, 0
    %v80 = vsel %vm63, %v42, 0
    %v83 = vsel %vm63, %v43, 0
    %v86 = vsel %vm63, %v44, 0
    %88 = vmatpush.msra.mxu0 0.0
    %89 = vmatpush.msra.mxu0 0.0
    %90 = vmatpush.msra.mxu0 0.0
    %91 = vmatpush.msra.mxu0 0.0
    %92 = vmatpush.msra.mxu0 0.0
    %93 = vmatpush.msra.mxu0 0.0
    %94 = vmatpush.msra.mxu0 0.0
    %95 = vmatpush.msra.mxu0 0.0
    %96 = vmatpush.msra.mxu0 0.0
    %97 = vmatpush.msra.mxu0 0.0
    %98 = vmatpush.msra.mxu0 0.0
    %99 = vmatpush.msra.mxu0 0.0
    %100 = vmatpush.msra.mxu0 0.0
    %101 = vmatpush.msra.mxu0 0.0
    %102 = vmatpush.msra.mxu0 %v49
    %103 = vmatpush.msra.mxu0 %v45
    %104 = vmatmul.f32.gmra.mxu0 %v65
    %v105 = vpop.f32.mrf.mxu0
    %v106 = vadd.f32 %v55, %v105
    %107 = vmatmul.f32.gmra.mxu0 %v68
    %v108 = vpop.f32.mrf.mxu0
    %v109 = vadd.f32 %v55, %v108
    %110 = vmatmul.f32.gmra.mxu0 %v71
    %v111 = vpop.f32.mrf.mxu0
    %v112 = vadd.f32 %v55, %v111
    %113 = vmatmul.f32.gmra.mxu0 %v74
    %v114 = vpop.f32.mrf.mxu0
    %v115 = vadd.f32 %v55, %v114
    %116 = vmatmul.f32.gmra.mxu0 %v77
    %v117 = vpop.f32.mrf.mxu0
    %v118 = vadd.f32 %v55, %v117
    %119 = vmatmul.f32.gmra.mxu0 %v80
    %v120 = vpop.f32.mrf.mxu0
    %v121 = vadd.f32 %v55, %v120
    %122 = vmatmul.f32.gmra.mxu0 %v83
    %v123 = vpop.f32.mrf.mxu0
    %v124 = vadd.f32 %v55, %v123
    %125 = vmatmul.f32.gmra.mxu0 %v86
    %v126 = vpop.f32.mrf.mxu0
    %v127 = vadd.f32 %v55, %v126
    %128 = vdwg.mxu0
    %129 = vmatpush.msra.mxu0 0.0
    %130 = vmatpush.msra.mxu0 0.0
    %131 = vmatpush.msra.mxu0 0.0
    %132 = vmatpush.msra.mxu0 0.0
    %133 = vmatpush.msra.mxu0 0.0
    %134 = vmatpush.msra.mxu0 0.0
    %135 = vmatpush.msra.mxu0 0.0
    %136 = vmatpush.msra.mxu0 0.0
    %137 = vmatpush.msra.mxu0 0.0
    %138 = vmatpush.msra.mxu0 0.0
    %139 = vmatpush.msra.mxu0 0.0
    %140 = vmatpush.msra.mxu0 0.0
    %141 = vmatpush.msra.mxu0 0.0
    %142 = vmatpush.msra.mxu0 0.0
    %143 = vmatpush.msra.mxu0 %v50
    %144 = vmatpush.msra.mxu0 %v46
    %145 = vmatmul.f32.gmra.mxu0 %v65
    %v146 = vpop.f32.mrf.mxu0
    %v147 = vadd.f32 %v56, %v146
    %148 = vmatmul.f32.gmra.mxu0 %v68
    %v149 = vpop.f32.mrf.mxu0
    %v150 = vadd.f32 %v56, %v149
    %151 = vmatmul.f32.gmra.mxu0 %v71
    %v152 = vpop.f32.mrf.mxu0
    %v153 = vadd.f32 %v56, %v152
    %154 = vmatmul.f32.gmra.mxu0 %v74
    %v155 = vpop.f32.mrf.mxu0
    %v156 = vadd.f32 %v56, %v155
    %157 = vmatmul.f32.gmra.mxu0 %v77
    %v158 = vpop.f32.mrf.mxu0
    %v159 = vadd.f32 %v56, %v158
    %160 = vmatmul.f32.gmra.mxu0 %v80
    %v161 = vpop.f32.mrf.mxu0
    %v162 = vadd.f32 %v56, %v161
    %163 = vmatmul.f32.gmra.mxu0 %v83
    %v164 = vpop.f32.mrf.mxu0
    %v165 = vadd.f32 %v56, %v164
    %166 = vmatmul.f32.gmra.mxu0 %v86
    %v167 = vpop.f32.mrf.mxu0
    %v168 = vadd.f32 %v56, %v167
    %169 = vdwg.mxu0
    %170 = vmatpush.msra.mxu0 0.0
    %171 = vmatpush.msra.mxu0 0.0
    %172 = vmatpush.msra.mxu0 0.0
    %173 = vmatpush.msra.mxu0 0.0
    %174 = vmatpush.msra.mxu0 0.0
    %175 = vmatpush.msra.mxu0 0.0
    %176 = vmatpush.msra.mxu0 0.0
    %177 = vmatpush.msra.mxu0 0.0
    %178 = vmatpush.msra.mxu0 0.0
    %179 = vmatpush.msra.mxu0 0.0
    %180 = vmatpush.msra.mxu0 0.0
    %181 = vmatpush.msra.mxu0 0.0
    %182 = vmatpush.msra.mxu0 0.0
    %183 = vmatpush.msra.mxu0 0.0
    %184 = vmatpush.msra.mxu0 %v51
    %185 = vmatpush.msra.mxu0 %v47
    %186 = vmatmul.f32.gmra.mxu0 %v65
    %v187 = vpop.f32.mrf.mxu0
    %v188 = vadd.f32 %v57, %v187
    %189 = vmatmul.f32.gmra.mxu0 %v68
    %v190 = vpop.f32.mrf.mxu0
    %v191 = vadd.f32 %v57, %v190
    %192 = vmatmul.f32.gmra.mxu0 %v71
    %v193 = vpop.f32.mrf.mxu0
    %v194 = vadd.f32 %v57, %v193
    %195 = vmatmul.f32.gmra.mxu0 %v74
    %v196 = vpop.f32.mrf.mxu0
    %v197 = vadd.f32 %v57, %v196
    %198 = vmatmul.f32.gmra.mxu0 %v77
    %v199 = vpop.f32.mrf.mxu0
    %v200 = vadd.f32 %v57, %v199
    %201 = vmatmul.f32.gmra.mxu0 %v80
    %v202 = vpop.f32.mrf.mxu0
    %v203 = vadd.f32 %v57, %v202
    %204 = vmatmul.f32.gmra.mxu0 %v83
    %v205 = vpop.f32.mrf.mxu0
    %v206 = vadd.f32 %v57, %v205
    %207 = vmatmul.f32.gmra.mxu0 %v86
    %v208 = vpop.f32.mrf.mxu0
    %v209 = vadd.f32 %v57, %v208
    %210 = vdwg.mxu0
    %211 = vmatpush.msra.mxu0 0.0
    %212 = vmatpush.msra.mxu0 0.0
    %213 = vmatpush.msra.mxu0 0.0
    %214 = vmatpush.msra.mxu0 0.0
    %215 = vmatpush.msra.mxu0 0.0
    %216 = vmatpush.msra.mxu0 0.0
    %217 = vmatpush.msra.mxu0 0.0
    %218 = vmatpush.msra.mxu0 0.0
    %219 = vmatpush.msra.mxu0 0.0
    %220 = vmatpush.msra.mxu0 0.0
    %221 = vmatpush.msra.mxu0 0.0
    %222 = vmatpush.msra.mxu0 0.0
    %223 = vmatpush.msra.mxu0 0.0
    %224 = vmatpush.msra.mxu0 0.0
    %225 = vmatpush.msra.mxu0 %v52
    %226 = vmatpush.msra.mxu0 %v48
    %227 = vmatmul.f32.gmra.mxu0 %v65
    %v228 = vpop.f32.mrf.mxu0
    %v229 = vadd.f32 %v58, %v228
    %230 = vmatmul.f32.gmra.mxu0 %v68
    %v231 = vpop.f32.mrf.mxu0
    %v232 = vadd.f32 %v58, %v231
    %233 = vmatmul.f32.gmra.mxu0 %v71
    %v234 = vpop.f32.mrf.mxu0
    %v235 = vadd.f32 %v58, %v234
    %236 = vmatmul.f32.gmra.mxu0 %v74
    %v237 = vpop.f32.mrf.mxu0
    %v238 = vadd.f32 %v58, %v237
    %239 = vmatmul.f32.gmra.mxu0 %v77
    %v240 = vpop.f32.mrf.mxu0
    %v241 = vadd.f32 %v58, %v240
    %242 = vmatmul.f32.gmra.mxu0 %v80
    %v243 = vpop.f32.mrf.mxu0
    %v244 = vadd.f32 %v58, %v243
    %245 = vmatmul.f32.gmra.mxu0 %v83
    %v246 = vpop.f32.mrf.mxu0
    %v247 = vadd.f32 %v58, %v246
    %248 = vmatmul.f32.gmra.mxu0 %v86
    %v249 = vpop.f32.mrf.mxu0
    %v250 = vadd.f32 %v58, %v249
    %251 = vdwg.mxu0
    %252 = vst [vmem:[#allocation2] sm:$0xff] %v106
    %253 = vst [vmem:[#allocation2 + $0x8] sm:$0xff] %v147
    %254 = vst [vmem:[#allocation2 + $0x10] sm:$0xff] %v188
    %255 = vst [vmem:[#allocation2 + $0x18] sm:$0xff] %v229
    %256 = vst [vmem:[#allocation2 + $0x20] sm:$0xff] %v109
    %257 = vst [vmem:[#allocation2 + $0x28] sm:$0xff] %v150
    %258 = vst [vmem:[#allocation2 + $0x30] sm:$0xff] %v191
    %259 = vst [vmem:[#allocation2 + $0x38] sm:$0xff] %v232
    %260 = vst [vmem:[#allocation2 + $0x40] sm:$0xff] %v112
    %261 = vst [vmem:[#allocation2 + $0x48] sm:$0xff] %v153
    %262 = vst [vmem:[#allocation2 + $0x50] sm:$0xff] %v194
    %263 = vst [vmem:[#allocation2 + $0x58] sm:$0xff] %v235
    %264 = vst [vmem:[#allocation2 + $0x60] sm:$0xff] %v115
    %265 = vst [vmem:[#allocation2 + $0x68] sm:$0xff] %v156
    %266 = vst [vmem:[#allocation2 + $0x70] sm:$0xff] %v197
    %267 = vst [vmem:[#allocation2 + $0x78] sm:$0xff] %v238
    %268 = vst [vmem:[#allocation2 + $0x80] sm:$0xff] %v118
    %269 = vst [vmem:[#allocation2 + $0x88] sm:$0xff] %v159
    %270 = vst [vmem:[#allocation2 + $0x90] sm:$0xff] %v200
    %271 = vst [vmem:[#allocation2 + $0x98] sm:$0xff] %v241
    %272 = vst [vmem:[#allocation2 + $0xa0] sm:$0xff] %v121
    %273 = vst [vmem:[#allocation2 + $0xa8] sm:$0xff] %v162
    %274 = vst [vmem:[#allocation2 + $0xb0] sm:$0xff] %v203
    %275 = vst [vmem:[#allocation2 + $0xb8] sm:$0xff] %v244
    %276 = vst [vmem:[#allocation2 + $0xc0] sm:$0xff] %v124
    %277 = vst [vmem:[#allocation2 + $0xc8] sm:$0xff] %v165
    %278 = vst [vmem:[#allocation2 + $0xd0] sm:$0xff] %v206
    %279 = vst [vmem:[#allocation2 + $0xd8] sm:$0xff] %v247
    %280 = vst [vmem:[#allocation2 + $0xe0] sm:$0xff] %v127
    %281 = vst [vmem:[#allocation2 + $0xe8] sm:$0xff] %v168
    %282 = vst [vmem:[#allocation2 + $0xf0] sm:$0xff] %v209
    %283 = vst [vmem:[#allocation2 + $0xf8] sm:$0xff] %v250
    %v284 = vld [vmem:[%s1] sm:$0xff]
    %v285 = vld [vmem:[#allocation2] sm:$0xff]
    %v286 = vld [vmem:[#allocation2 + $0x8] sm:$0xff]
    %v287 = vld [vmem:[#allocation2 + $0x10] sm:$0xff]
    %v288 = vld [vmem:[#allocation2 + $0x18] sm:$0xff]
    %v289 = vld [vmem:[#allocation3] sm:$0xff]
    %v290 = vld [vmem:[#allocation3 + $0x8] sm:$0xff]
    %v291 = vld [vmem:[#allocation3 + $0x10] sm:$0xff]
    %v292 = vld [vmem:[#allocation3 + $0x18] sm:$0xff]
    %v293 = vld [vmem:[#allocation3 + $0x20] sm:$0xff]
    %v294 = vld [vmem:[#allocation3 + $0x28] sm:$0xff]
    %v295 = vld [vmem:[#allocation3 + $0x30] sm:$0xff]
    %v296 = vld [vmem:[#allocation3 + $0x38] sm:$0xff]
    %v297 = vld [vmem:[#allocation3 + $0x40] sm:$0xff]
    %v298 = vld [vmem:[#allocation3 + $0x48] sm:$0xff]
    %v299 = vld [vmem:[#allocation3 + $0x50] sm:$0xff]
    %v300 = vld [vmem:[#allocation3 + $0x58] sm:$0xff]
    %v301 = vld [vmem:[#allocation3 + $0x60] sm:$0xff]
    %v302 = vld [vmem:[#allocation3 + $0x68] sm:$0xff]
    %v303 = vld [vmem:[#allocation3 + $0x70] sm:$0xff]
    %v304 = vld [vmem:[#allocation3 + $0x78] sm:$0xff]
    %v305 = vld [vmem:[#allocation3 + $0x80] sm:$0xff]
    %v306 = vld [vmem:[#allocation3 + $0x88] sm:$0xff]
    %v307 = vld [vmem:[#allocation3 + $0x90] sm:$0xff]
    %v308 = vld [vmem:[#allocation3 + $0x98] sm:$0xff]
    %v309 = vld [vmem:[#allocation3 + $0xa0] sm:$0xff]
    %v310 = vld [vmem:[#allocation3 + $0xa8] sm:$0xff]
    %v311 = vld [vmem:[#allocation3 + $0xb0] sm:$0xff]
    %v312 = vld [vmem:[#allocation3 + $0xb8] sm:$0xff]
    %v313 = vld [vmem:[#allocation3 + $0xc0] sm:$0xff]
    %v314 = vld [vmem:[#allocation3 + $0xc8] sm:$0xff]
    %v315 = vld [vmem:[#allocation3 + $0xd0] sm:$0xff]
    %v316 = vld [vmem:[#allocation3 + $0xd8] sm:$0xff]
    %v317 = vld [vmem:[#allocation3 + $0xe0] sm:$0xff]
    %v318 = vld [vmem:[#allocation3 + $0xe8] sm:$0xff]
    %v319 = vld [vmem:[#allocation3 + $0xf0] sm:$0xff]
    %v320 = vld [vmem:[#allocation3 + $0xf8] sm:$0xff]
    %v321 = vld [vmem:[#allocation3 + $0x100] sm:$0xff]
    %v322 = vld [vmem:[#allocation3 + $0x108] sm:$0xff]
    %v323 = vld [vmem:[#allocation3 + $0x110] sm:$0xff]
    %v324 = vld [vmem:[#allocation3 + $0x118] sm:$0xff]
    %v325 = vld [vmem:[#allocation3 + $0x120] sm:$0xff]
    %v326 = vld [vmem:[#allocation3 + $0x128] sm:$0xff]
    %v327 = vld [vmem:[#allocation3 + $0x130] sm:$0xff]
    %v328 = vld [vmem:[#allocation3 + $0x138] sm:$0xff]
    %v329 = vld [vmem:[#allocation3 + $0x140] sm:$0xff]
    %v330 = vld [vmem:[#allocation3 + $0x148] sm:$0xff]
    %v331 = vld [vmem:[#allocation3 + $0x150] sm:$0xff]
    %v332 = vld [vmem:[#allocation3 + $0x158] sm:$0xff]
    %v333 = vld [vmem:[#allocation3 + $0x160] sm:$0xff]
    %v334 = vld [vmem:[#allocation3 + $0x168] sm:$0xff]
    %v335 = vld [vmem:[#allocation3 + $0x170] sm:$0xff]
    %v336 = vld [vmem:[#allocation3 + $0x178] sm:$0xff]
    %v337 = vld [vmem:[#allocation3 + $0x180] sm:$0xff]
    %v338 = vld [vmem:[#allocation3 + $0x188] sm:$0xff]
    %v339 = vld [vmem:[#allocation3 + $0x190] sm:$0xff]
    %v340 = vld [vmem:[#allocation3 + $0x198] sm:$0xff]
    %v341 = vld [vmem:[#allocation3 + $0x1a0] sm:$0xff]
    %v342 = vld [vmem:[#allocation3 + $0x1a8] sm:$0xff]
    %v343 = vld [vmem:[#allocation3 + $0x1b0] sm:$0xff]
    %v344 = vld [vmem:[#allocation3 + $0x1b8] sm:$0xff]
    %v345 = vld [vmem:[#allocation3 + $0x1c0] sm:$0xff]
    %v346 = vld [vmem:[#allocation3 + $0x1c8] sm:$0xff]
    %v347 = vld [vmem:[#allocation3 + $0x1d0] sm:$0xff]
    %v348 = vld [vmem:[#allocation3 + $0x1d8] sm:$0xff]
    %v349 = vld [vmem:[#allocation3 + $0x1e0] sm:$0xff]
    %v350 = vld [vmem:[#allocation3 + $0x1e8] sm:$0xff]
    %v351 = vld [vmem:[#allocation3 + $0x1f0] sm:$0xff]
    %v352 = vld [vmem:[#allocation3 + $0x1f8] sm:$0xff]
    %353 = vmatpush.msra.mxu0 %v349
    %354 = vmatpush.msra.mxu0 %v345
    %355 = vmatpush.msra.mxu0 %v341
    %356 = vmatpush.msra.mxu0 %v337
    %357 = vmatpush.msra.mxu0 %v333
    %358 = vmatpush.msra.mxu0 %v329
    %359 = vmatpush.msra.mxu0 %v325
    %360 = vmatpush.msra.mxu0 %v321
    %361 = vmatpush.msra.mxu0 %v317
    %362 = vmatpush.msra.mxu0 %v313
    %363 = vmatpush.msra.mxu0 %v309
    %364 = vmatpush.msra.mxu0 %v305
    %365 = vmatpush.msra.mxu0 %v301
    %366 = vmatpush.msra.mxu0 %v297
    %367 = vmatpush.msra.mxu0 %v293
    %368 = vmatpush.msra.mxu0 %v289
    %369 = vmatmul.f32.gmra.mxu0 0.0
    %v370 = vpop.f32.mrf.mxu0
    %v371 = vadd.f32 0.0, %v370
    %372 = vdwg.mxu0
    %373 = vmatpush.msra.mxu0 %v350
    %374 = vmatpush.msra.mxu0 %v346
    %375 = vmatpush.msra.mxu0 %v342
    %376 = vmatpush.msra.mxu0 %v338
    %377 = vmatpush.msra.mxu0 %v334
    %378 = vmatpush.msra.mxu0 %v330
    %379 = vmatpush.msra.mxu0 %v326
    %380 = vmatpush.msra.mxu0 %v322
    %381 = vmatpush.msra.mxu0 %v318
    %382 = vmatpush.msra.mxu0 %v314
    %383 = vmatpush.msra.mxu0 %v310
    %384 = vmatpush.msra.mxu0 %v306
    %385 = vmatpush.msra.mxu0 %v302
    %386 = vmatpush.msra.mxu0 %v298
    %387 = vmatpush.msra.mxu0 %v294
    %388 = vmatpush.msra.mxu0 %v290
    %389 = vmatmul.f32.gmra.mxu0 0.0
    %v390 = vpop.f32.mrf.mxu0
    %v391 = vadd.f32 0.0, %v390
    %392 = vdwg.mxu0
    %393 = vmatpush.msra.mxu0 %v351
    %394 = vmatpush.msra.mxu0 %v347
    %395 = vmatpush.msra.mxu0 %v343
    %396 = vmatpush.msra.mxu0 %v339
    %397 = vmatpush.msra.mxu0 %v335
    %398 = vmatpush.msra.mxu0 %v331
    %399 = vmatpush.msra.mxu0 %v327
    %400 = vmatpush.msra.mxu0 %v323
    %401 = vmatpush.msra.mxu0 %v319
    %402 = vmatpush.msra.mxu0 %v315
    %403 = vmatpush.msra.mxu0 %v311
    %404 = vmatpush.msra.mxu0 %v307
    %405 = vmatpush.msra.mxu0 %v303
    %406 = vmatpush.msra.mxu0 %v299
    %407 = vmatpush.msra.mxu0 %v295
    %408 = vmatpush.msra.mxu0 %v291
    %409 = vmatmul.f32.gmra.mxu0 0.0
    %v410 = vpop.f32.mrf.mxu0
    %v411 = vadd.f32 0.0, %v410
    %412 = vdwg.mxu0
    %413 = vmatpush.msra.mxu0 %v352
    %414 = vmatpush.msra.mxu0 %v348
    %415 = vmatpush.msra.mxu0 %v344
    %416 = vmatpush.msra.mxu0 %v340
    %417 = vmatpush.msra.mxu0 %v336
    %418 = vmatpush.msra.mxu0 %v332
    %419 = vmatpush.msra.mxu0 %v328
    %420 = vmatpush.msra.mxu0 %v324
    %421 = vmatpush.msra.mxu0 %v320
    %422 = vmatpush.msra.mxu0 %v316
    %423 = vmatpush.msra.mxu0 %v312
    %424 = vmatpush.msra.mxu0 %v308
    %425 = vmatpush.msra.mxu0 %v304
    %426 = vmatpush.msra.mxu0 %v300
    %427 = vmatpush.msra.mxu0 %v296
    %428 = vmatpush.msra.mxu0 %v292
    %429 = vmatmul.f32.gmra.mxu0 0.0
    %v430 = vpop.f32.mrf.mxu0
    %v431 = vadd.f32 0.0, %v430
    %432 = vdwg.mxu0
    %v433 = vadd.f32 %v285, %v371
    %v434 = vadd.f32 %v286, %v391
    %v435 = vadd.f32 %v287, %v411
    %v436 = vadd.f32 %v288, %v431
    %v437 = vxor.u32 %v433, 2147483648
    %v438 = vmul.f32 %v437, 1.442695
    %v439 = vpow.pop %v438
    %v440 = vadd.f32 %v439, 1.0
    %v441 = vrcp.pop %v440
    %v442 = vmul.f32 %v440, %v441
    %v443 = vsub.f32 1.0, %v442
    %v444 = vmul.f32 %v441, %v443
    %v445 = vadd.f32 %v441, %v444
    %vm446 = vweird.f32 %v440
    %vm447 = vweird.f32 %v441
    %vm448 = vmor %vm446, %vm447
    %v449 = vsel %vm448, %v441, %v445
    %v450 = vand.u32 2147483647, %v440
    %vm451 = vcmp.eq.f32.partialorder %v450, 8.507059e+37
    %v452 = vand.u32 %v440, 2147483648
    %v453 = vor.u32 1.1754944e-38, %v452
    %v454 = vsel %vm451, %v453, %v449
    %v455 = vmul.f32 1.0, %v454
    %v456 = vxor.u32 %v434, 2147483648
    %v457 = vmul.f32 %v456, 1.442695
    %v458 = vpow.pop %v457
    %v459 = vadd.f32 %v458, 1.0
    %v460 = vrcp.pop %v459
    %v461 = vmul.f32 %v459, %v460
    %v462 = vsub.f32 1.0, %v461
    %v463 = vmul.f32 %v460, %v462
    %v464 = vadd.f32 %v460, %v463
    %vm465 = vweird.f32 %v459
    %vm466 = vweird.f32 %v460
    %vm467 = vmor %vm465, %vm466
    %v468 = vsel %vm467, %v460, %v464
    %v469 = vand.u32 2147483647, %v459
    %vm470 = vcmp.eq.f32.partialorder %v469, 8.507059e+37
    %v471 = vand.u32 %v459, 2147483648
    %v472 = vor.u32 1.1754944e-38, %v471
    %v473 = vsel %vm470, %v472, %v468
    %v474 = vmul.f32 1.0, %v473
    %v475 = vtanh.pop %v435
    %v476 = vxor.u32 %v436, 2147483648
    %v477 = vmul.f32 %v476, 1.442695
    %v478 = vpow.pop %v477
    %v479 = vadd.f32 %v478, 1.0
    %v480 = vrcp.pop %v479
    %v481 = vmul.f32 %v479, %v480
    %v482 = vsub.f32 1.0, %v481
    %v483 = vmul.f32 %v480, %v482
    %v484 = vadd.f32 %v480, %v483
    %vm485 = vweird.f32 %v479
    %vm486 = vweird.f32 %v480
    %vm487 = vmor %vm485, %vm486
    %v488 = vsel %vm487, %v480, %v484
    %v489 = vand.u32 2147483647, %v479
    %vm490 = vcmp.eq.f32.partialorder %v489, 8.507059e+37
    %v491 = vand.u32 %v479, 2147483648
    %v492 = vor.u32 1.1754944e-38, %v491
    %v493 = vsel %vm490, %v492, %v488
    %v494 = vmul.f32 1.0, %v493
    %v495 = vmul.f32 %v474, 0.0
    %v496 = vmul.f32 %v455, %v475
    %v497 = vadd.f32 %v495, %v496
    %v498 = vtanh.pop %v497
    %v499 = vmul.f32 %v494, %v498
    %vm500 = vcmp.eq.s32.totalorder %v284, 1
    %v501 = vsel %vm500, 1, 0
    %502 = vset.pattern.permute.xlu0 0
    %503 = vperm.xlu0 %502, %v501
    %v504 = vpop.permute.xlu0 %503
    %vm505 = vcmp.eq.s32.totalorder %v504, 1
    %v506 = vsel %vm505, %v499, 0.0
    %v507 = vld [vmem:[#allocation2 + $0x20] sm:$0xff]
    %v508 = vld [vmem:[#allocation2 + $0x28] sm:$0xff]
    %v509 = vld [vmem:[#allocation2 + $0x30] sm:$0xff]
    %v510 = vld [vmem:[#allocation2 + $0x38] sm:$0xff]
    %511 = vmatpush.msra.mxu0 %v349
    %512 = vmatpush.msra.mxu0 %v345
    %513 = vmatpush.msra.mxu0 %v341
    %514 = vmatpush.msra.mxu0 %v337
    %515 = vmatpush.msra.mxu0 %v333
    %516 = vmatpush.msra.mxu0 %v329
    %517 = vmatpush.msra.mxu0 %v325
    %518 = vmatpush.msra.mxu0 %v321
    %519 = vmatpush.msra.mxu0 %v317
    %520 = vmatpush.msra.mxu0 %v313
    %521 = vmatpush.msra.mxu0 %v309
    %522 = vmatpush.msra.mxu0 %v305
    %523 = vmatpush.msra.mxu0 %v301
    %524 = vmatpush.msra.mxu0 %v297
    %525 = vmatpush.msra.mxu0 %v293
    %526 = vmatpush.msra.mxu0 %v289
    %527 = vmatmul.f32.gmra.mxu0 %v499
    %v528 = vpop.f32.mrf.mxu0
    %v529 = vadd.f32 0.0, %v528
    %530 = vdwg.mxu0
    %531 = vmatpush.msra.mxu0 %v350
    %532 = vmatpush.msra.mxu0 %v346
    %533 = vmatpush.msra.mxu0 %v342
    %534 = vmatpush.msra.mxu0 %v338
    %535 = vmatpush.msra.mxu0 %v334
    %536 = vmatpush.msra.mxu0 %v330
    %537 = vmatpush.msra.mxu0 %v326
    %538 = vmatpush.msra.mxu0 %v322
    %539 = vmatpush.msra.mxu0 %v318
    %540 = vmatpush.msra.mxu0 %v314
    %541 = vmatpush.msra.mxu0 %v310
    %542 = vmatpush.msra.mxu0 %v306
    %543 = vmatpush.msra.mxu0 %v302
    %544 = vmatpush.msra.mxu0 %v298
    %545 = vmatpush.msra.mxu0 %v294
    %546 = vmatpush.msra.mxu0 %v290
    %547 = vmatmul.f32.gmra.mxu0 %v499
    %v548 = vpop.f32.mrf.mxu0
    %v549 = vadd.f32 0.0, %v548
    %550 = vdwg.mxu0
    %551 = vmatpush.msra.mxu0 %v351
    %552 = vmatpush.msra.mxu0 %v347
    %553 = vmatpush.msra.mxu0 %v343
    %554 = vmatpush.msra.mxu0 %v339
    %555 = vmatpush.msra.mxu0 %v335
    %556 = vmatpush.msra.mxu0 %v331
    %557 = vmatpush.msra.mxu0 %v327
    %558 = vmatpush.msra.mxu0 %v323
    %559 = vmatpush.msra.mxu0 %v319
    %560 = vmatpush.msra.mxu0 %v315
    %561 = vmatpush.msra.mxu0 %v311
    %562 = vmatpush.msra.mxu0 %v307
    %563 = vmatpush.msra.mxu0 %v303
    %564 = vmatpush.msra.mxu0 %v299
    %565 = vmatpush.msra.mxu0 %v295
    %566 = vmatpush.msra.mxu0 %v291
    %567 = vmatmul.f32.gmra.mxu0 %v499
    %v568 = vpop.f32.mrf.mxu0
    %v569 = vadd.f32 0.0, %v568
    %570 = vdwg.mxu0
    %571 = vmatpush.msra.mxu0 %v352
    %572 = vmatpush.msra.mxu0 %v348
    %573 = vmatpush.msra.mxu0 %v344
    %574 = vmatpush.msra.mxu0 %v340
    %575 = vmatpush.msra.mxu0 %v336
    %576 = vmatpush.msra.mxu0 %v332
    %577 = vmatpush.msra.mxu0 %v328
    %578 = vmatpush.msra.mxu0 %v324
    %579 = vmatpush.msra.mxu0 %v320
    %580 = vmatpush.msra.mxu0 %v316
    %581 = vmatpush.msra.mxu0 %v312
    %582 = vmatpush.msra.mxu0 %v308
    %583 = vmatpush.msra.mxu0 %v304
    %584 = vmatpush.msra.mxu0 %v300
    %585 = vmatpush.msra.mxu0 %v296
    %586 = vmatpush.msra.mxu0 %v292
    %587 = vmatmul.f32.gmra.mxu0 %v499
    %v588 = vpop.f32.mrf.mxu0
    %v589 = vadd.f32 0.0, %v588
    %590 = vdwg.mxu0
    %v591 = vadd.f32 %v507, %v529
    %v592 = vadd.f32 %v508, %v549
    %v593 = vadd.f32 %v509, %v569
    %v594 = vadd.f32 %v510, %v589
    %v595 = vxor.u32 %v591, 2147483648
    %v596 = vmul.f32 %v595, 1.442695
    %v597 = vpow.pop %v596
    %v598 = vadd.f32 %v597, 1.0
    %v599 = vrcp.pop %v598
    %v600 = vmul.f32 %v598, %v599
    %v601 = vsub.f32 1.0, %v600
    %v602 = vmul.f32 %v599, %v601
    %v603 = vadd.f32 %v599, %v602
    %vm604 = vweird.f32 %v598
    %vm605 = vweird.f32 %v599
    %vm606 = vmor %vm604, %vm605
    %v607 = vsel %vm606, %v599, %v603
    %v608 = vand.u32 2147483647, %v598
    %vm609 = vcmp.eq.f32.partialorder %v608, 8.507059e+37
    %v610 = vand.u32 %v598, 2147483648
    %v611 = vor.u32 1.1754944e-38, %v610
    %v612 = vsel %vm609, %v611, %v607
    %v613 = vmul.f32 1.0, %v612
    %v614 = vxor.u32 %v592, 2147483648
    %v615 = vmul.f32 %v614, 1.442695
    %v616 = vpow.pop %v615
    %v617 = vadd.f32 %v616, 1.0
    %v618 = vrcp.pop %v617
    %v619 = vmul.f32 %v617, %v618
    %v620 = vsub.f32 1.0, %v619
    %v621 = vmul.f32 %v618, %v620
    %v622 = vadd.f32 %v618, %v621
    %vm623 = vweird.f32 %v617
    %vm624 = vweird.f32 %v618
    %vm625 = vmor %vm623, %vm624
    %v626 = vsel %vm625, %v618, %v622
    %v627 = vand.u32 2147483647, %v617
    %vm628 = vcmp.eq.f32.partialorder %v627, 8.507059e+37
    %v629 = vand.u32 %v617, 2147483648
    %v630 = vor.u32 1.1754944e-38, %v629
    %v631 = vsel %vm628, %v630, %v626
    %v632 = vmul.f32 1.0, %v631
    %v633 = vtanh.pop %v593
    %v634 = vxor.u32 %v594, 2147483648
    %v635 = vmul.f32 %v634, 1.442695
    %v636 = vpow.pop %v635
    %v637 = vadd.f32 %v636, 1.0
    %v638 = vrcp.pop %v637
    %v639 = vmul.f32 %v637, %v638
    %v640 = vsub.f32 1.0, %v639
    %v641 = vmul.f32 %v638, %v640
    %v642 = vadd.f32 %v638, %v641
    %vm643 = vweird.f32 %v637
    %vm644 = vweird.f32 %v638
    %vm645 = vmor %vm643, %vm644
    %v646 = vsel %vm645, %v638, %v642
    %v647 = vand.u32 2147483647, %v637
    %vm648 = vcmp.eq.f32.partialorder %v647, 8.507059e+37
    %v649 = vand.u32 %v637, 2147483648
    %v650 = vor.u32 1.1754944e-38, %v649
    %v651 = vsel %vm648, %v650, %v646
    %v652 = vmul.f32 1.0, %v651
    %v653 = vmul.f32 %v632, %v497
    %v654 = vmul.f32 %v613, %v633
    %v655 = vadd.f32 %v653, %v654
    %v656 = vtanh.pop %v655
    %v657 = vmul.f32 %v652, %v656
    %vm658 = vcmp.eq.s32.totalorder %v284, 2
    %v659 = vsel %vm658, 1, 0
    %660 = vset.pattern.permute.xlu0 0
    %661 = vperm.xlu0 %660, %v659
    %v662 = vpop.permute.xlu0 %661
    %vm663 = vcmp.eq.s32.totalorder %v662, 1
    %v664 = vsel %vm663, %v657, %v506
    %v665 = vld [vmem:[#allocation2 + $0x40] sm:$0xff]
    %v666 = vld [vmem:[#allocation2 + $0x48] sm:$0xff]
    %v667 = vld [vmem:[#allocation2 + $0x50] sm:$0xff]
    %v668 = vld [vmem:[#allocation2 + $0x58] sm:$0xff]
    %669 = vmatpush.msra.mxu0 %v349
    %670 = vmatpush.msra.mxu0 %v345
    %671 = vmatpush.msra.mxu0 %v341
    %672 = vmatpush.msra.mxu0 %v337
    %673 = vmatpush.msra.mxu0 %v333
    %674 = vmatpush.msra.mxu0 %v329
    %675 = vmatpush.msra.mxu0 %v325
    %676 = vmatpush.msra.mxu0 %v321
    %677 = vmatpush.msra.mxu0 %v317
    %678 = vmatpush.msra.mxu0 %v313
    %679 = vmatpush.msra.mxu0 %v309
    %680 = vmatpush.msra.mxu0 %v305
    %681 = vmatpush.msra.mxu0 %v301
    %682 = vmatpush.msra.mxu0 %v297
    %683 = vmatpush.msra.mxu0 %v293
    %684 = vmatpush.msra.mxu0 %v289
    %685 = vmatmul.f32.gmra.mxu0 %v657
    %v686 = vpop.f32.mrf.mxu0
    %v687 = vadd.f32 0.0, %v686
    %688 = vdwg.mxu0
    %689 = vmatpush.msra.mxu0 %v350
    %690 = vmatpush.msra.mxu0 %v346
    %691 = vmatpush.msra.mxu0 %v342
    %692 = vmatpush.msra.mxu0 %v338
    %693 = vmatpush.msra.mxu0 %v334
    %694 = vmatpush.msra.mxu0 %v330
    %695 = vmatpush.msra.mxu0 %v326
    %696 = vmatpush.msra.mxu0 %v322
    %697 = vmatpush.msra.mxu0 %v318
    %698 = vmatpush.msra.mxu0 %v314
    %699 = vmatpush.msra.mxu0 %v310
    %700 = vmatpush.msra.mxu0 %v306
    %701 = vmatpush.msra.mxu0 %v302
    %702 = vmatpush.msra.mxu0 %v298
    %703 = vmatpush.msra.mxu0 %v294
    %704 = vmatpush.msra.mxu0 %v290
    %705 = vmatmul.f32.gmra.mxu0 %v657
    %v706 = vpop.f32.mrf.mxu0
    %v707 = vadd.f32 0.0, %v706
    %708 = vdwg.mxu0
    %709 = vmatpush.msra.mxu0 %v351
    %710 = vmatpush.msra.mxu0 %v347
    %711 = vmatpush.msra.mxu0 %v343
    %712 = vmatpush.msra.mxu0 %v339
    %713 = vmatpush.msra.mxu0 %v335
    %714 = vmatpush.msra.mxu0 %v331
    %715 = vmatpush.msra.mxu0 %v327
    %716 = vmatpush.msra.mxu0 %v323
    %717 = vmatpush.msra.mxu0 %v319
    %718 = vmatpush.msra.mxu0 %v315
    %719 = vmatpush.msra.mxu0 %v311
    %720 = vmatpush.msra.mxu0 %v307
    %721 = vmatpush.msra.mxu0 %v303
    %722 = vmatpush.msra.mxu0 %v299
    %723 = vmatpush.msra.mxu0 %v295
    %724 = vmatpush.msra.mxu0 %v291
    %725 = vmatmul.f32.gmra.mxu0 %v657
    %v726 = vpop.f32.mrf.mxu0
    %v727 = vadd.f32 0.0, %v726
    %728 = vdwg.mxu0
    %729 = vmatpush.msra.mxu0 %v352
    %730 = vmatpush.msra.mxu0 %v348
    %731 = vmatpush.msra.mxu0 %v344
    %732 = vmatpush.msra.mxu0 %v340
    %733 = vmatpush.msra.mxu0 %v336
    %734 = vmatpush.msra.mxu0 %v332
    %735 = vmatpush.msra.mxu0 %v328
    %736 = vmatpush.msra.mxu0 %v324
    %737 = vmatpush.msra.mxu0 %v320
    %738 = vmatpush.msra.mxu0 %v316
    %739 = vmatpush.msra.mxu0 %v312
    %740 = vmatpush.msra.mxu0 %v308
    %741 = vmatpush.msra.mxu0 %v304
    %742 = vmatpush.msra.mxu0 %v300
    %743 = vmatpush.msra.mxu0 %v296
    %744 = vmatpush.msra.mxu0 %v292
    %745 = vmatmul.f32.gmra.mxu0 %v657
    %v746 = vpop.f32.mrf.mxu0
    %v747 = vadd.f32 0.0, %v746
    %748 = vdwg.mxu0
    %v749 = vadd.f32 %v665, %v687
    %v750 = vadd.f32 %v666, %v707
    %v751 = vadd.f32 %v667, %v727
    %v752 = vadd.f32 %v668, %v747
    %v753 = vxor.u32 %v749, 2147483648
    %v754 = vmul.f32 %v753, 1.442695
    %v755 = vpow.pop %v754
    %v756 = vadd.f32 %v755, 1.0
    %v757 = vrcp.pop %v756
    %v758 = vmul.f32 %v756, %v757
    %v759 = vsub.f32 1.0, %v758
    %v760 = vmul.f32 %v757, %v759
    %v761 = vadd.f32 %v757, %v760
    %vm762 = vweird.f32 %v756
    %vm763 = vweird.f32 %v757
    %vm764 = vmor %vm762, %vm763
    %v765 = vsel %vm764, %v757, %v761
    %v766 = vand.u32 2147483647, %v756
    %vm767 = vcmp.eq.f32.partialorder %v766, 8.507059e+37
    %v768 = vand.u32 %v756, 2147483648
    %v769 = vor.u32 1.1754944e-38, %v768
    %v770 = vsel %vm767, %v769, %v765
    %v771 = vmul.f32 1.0, %v770
    %v772 = vxor.u32 %v750, 2147483648
    %v773 = vmul.f32 %v772, 1.442695
    %v774 = vpow.pop %v773
    %v775 = vadd.f32 %v774, 1.0
    %v776 = vrcp.pop %v775
    %v777 = vmul.f32 %v775, %v776
    %v778 = vsub.f32 1.0, %v777
    %v779 = vmul.f32 %v776, %v778
    %v780 = vadd.f32 %v776, %v779
    %vm781 = vweird.f32 %v775
    %vm782 = vweird.f32 %v776
    %vm783 = vmor %vm781, %vm782
    %v784 = vsel %vm783, %v776, %v780
    %v785 = vand.u32 2147483647, %v775
    %vm786 = vcmp.eq.f32.partialorder %v785, 8.507059e+37
    %v787 = vand.u32 %v775, 2147483648
    %v788 = vor.u32 1.1754944e-38, %v787
    %v789 = vsel %vm786, %v788, %v784
    %v790 = vmul.f32 1.0, %v789
    %v791 = vtanh.pop %v751
    %v792 = vxor.u32 %v752, 2147483648
    %v793 = vmul.f32 %v792, 1.442695
    %v794 = vpow.pop %v793
    %v795 = vadd.f32 %v794, 1.0
    %v796 = vrcp.pop %v795
    %v797 = vmul.f32 %v795, %v796
    %v798 = vsub.f32 1.0, %v797
    %v799 = vmul.f32 %v796, %v798
    %v800 = vadd.f32 %v796, %v799
    %vm801 = vweird.f32 %v795
    %vm802 = vweird.f32 %v796
    %vm803 = vmor %vm801, %vm802
    %v804 = vsel %vm803, %v796, %v800
    %v805 = vand.u32 2147483647, %v795
    %vm806 = vcmp.eq.f32.partialorder %v805, 8.507059e+37
    %v807 = vand.u32 %v795, 2147483648
    %v808 = vor.u32 1.1754944e-38, %v807
    %v809 = vsel %vm806, %v808, %v804
    %v810 = vmul.f32 1.0, %v809
    %v811 = vmul.f32 %v790, %v655
    %v812 = vmul.f32 %v771, %v791
    %v813 = vadd.f32 %v811, %v812
    %v814 = vtanh.pop %v813
    %v815 = vmul.f32 %v810, %v814
    %vm816 = vcmp.eq.s32.totalorder %v284, 3
    %v817 = vsel %vm816, 1, 0
    %818 = vset.pattern.permute.xlu0 0
    %819 = vperm.xlu0 %818, %v817
    %v820 = vpop.permute.xlu0 %819
    %vm821 = vcmp.eq.s32.totalorder %v820, 1
    %v822 = vsel %vm821, %v815, %v664
    %v823 = vld [vmem:[#allocation2 + $0x60] sm:$0xff]
    %v824 = vld [vmem:[#allocation2 + $0x68] sm:$0xff]
    %v825 = vld [vmem:[#allocation2 + $0x70] sm:$0xff]
    %v826 = vld [vmem:[#allocation2 + $0x78] sm:$0xff]
    %827 = vmatpush.msra.mxu0 %v349
    %828 = vmatpush.msra.mxu0 %v345
    %829 = vmatpush.msra.mxu0 %v341
    %830 = vmatpush.msra.mxu0 %v337
    %831 = vmatpush.msra.mxu0 %v333
    %832 = vmatpush.msra.mxu0 %v329
    %833 = vmatpush.msra.mxu0 %v325
    %834 = vmatpush.msra.mxu0 %v321
    %835 = vmatpush.msra.mxu0 %v317
    %836 = vmatpush.msra.mxu0 %v313
    %837 = vmatpush.msra.mxu0 %v309
    %838 = vmatpush.msra.mxu0 %v305
    %839 = vmatpush.msra.mxu0 %v301
    %840 = vmatpush.msra.mxu0 %v297
    %841 = vmatpush.msra.mxu0 %v293
    %842 = vmatpush.msra.mxu0 %v289
    %843 = vmatmul.f32.gmra.mxu0 %v815
    %v844 = vpop.f32.mrf.mxu0
    %v845 = vadd.f32 0.0, %v844
    %846 = vdwg.mxu0
    %847 = vmatpush.msra.mxu0 %v350
    %848 = vmatpush.msra.mxu0 %v346
    %849 = vmatpush.msra.mxu0 %v342
    %850 = vmatpush.msra.mxu0 %v338
    %851 = vmatpush.msra.mxu0 %v334
    %852 = vmatpush.msra.mxu0 %v330
    %853 = vmatpush.msra.mxu0 %v326
    %854 = vmatpush.msra.mxu0 %v322
    %855 = vmatpush.msra.mxu0 %v318
    %856 = vmatpush.msra.mxu0 %v314
    %857 = vmatpush.msra.mxu0 %v310
    %858 = vmatpush.msra.mxu0 %v306
    %859 = vmatpush.msra.mxu0 %v302
    %860 = vmatpush.msra.mxu0 %v298
    %861 = vmatpush.msra.mxu0 %v294
    %862 = vmatpush.msra.mxu0 %v290
    %863 = vmatmul.f32.gmra.mxu0 %v815
    %v864 = vpop.f32.mrf.mxu0
    %v865 = vadd.f32 0.0, %v864
    %866 = vdwg.mxu0
    %867 = vmatpush.msra.mxu0 %v351
    %868 = vmatpush.msra.mxu0 %v347
    %869 = vmatpush.msra.mxu0 %v343
    %870 = vmatpush.msra.mxu0 %v339
    %871 = vmatpush.msra.mxu0 %v335
    %872 = vmatpush.msra.mxu0 %v331
    %873 = vmatpush.msra.mxu0 %v327
    %874 = vmatpush.msra.mxu0 %v323
    %875 = vmatpush.msra.mxu0 %v319
    %876 = vmatpush.msra.mxu0 %v315
    %877 = vmatpush.msra.mxu0 %v311
    %878 = vmatpush.msra.mxu0 %v307
    %879 = vmatpush.msra.mxu0 %v303
    %880 = vmatpush.msra.mxu0 %v299
    %881 = vmatpush.msra.mxu0 %v295
    %882 = vmatpush.msra.mxu0 %v291
    %883 = vmatmul.f32.gmra.mxu0 %v815
    %v884 = vpop.f32.mrf.mxu0
    %v885 = vadd.f32 0.0, %v884
    %886 = vdwg.mxu0
    %887 = vmatpush.msra.mxu0 %v352
    %888 = vmatpush.msra.mxu0 %v348
    %889 = vmatpush.msra.mxu0 %v344
    %890 = vmatpush.msra.mxu0 %v340
    %891 = vmatpush.msra.mxu0 %v336
    %892 = vmatpush.msra.mxu0 %v332
    %893 = vmatpush.msra.mxu0 %v328
    %894 = vmatpush.msra.mxu0 %v324
    %895 = vmatpush.msra.mxu0 %v320
    %896 = vmatpush.msra.mxu0 %v316
    %897 = vmatpush.msra.mxu0 %v312
    %898 = vmatpush.msra.mxu0 %v308
    %899 = vmatpush.msra.mxu0 %v304
    %900 = vmatpush.msra.mxu0 %v300
    %901 = vmatpush.msra.mxu0 %v296
    %902 = vmatpush.msra.mxu0 %v292
    %903 = vmatmul.f32.gmra.mxu0 %v815
    %v904 = vpop.f32.mrf.mxu0
    %v905 = vadd.f32 0.0, %v904
    %906 = vdwg.mxu0
    %v907 = vadd.f32 %v823, %v845
    %v908 = vadd.f32 %v824, %v865
    %v909 = vadd.f32 %v825, %v885
    %v910 = vadd.f32 %v826, %v905
    %v911 = vxor.u32 %v907, 2147483648
    %v912 = vmul.f32 %v911, 1.442695
    %v913 = vpow.pop %v912
    %v914 = vadd.f32 %v913, 1.0
    %v915 = vrcp.pop %v914
    %v916 = vmul.f32 %v914, %v915
    %v917 = vsub.f32 1.0, %v916
    %v918 = vmul.f32 %v915, %v917
    %v919 = vadd.f32 %v915, %v918
    %vm920 = vweird.f32 %v914
    %vm921 = vweird.f32 %v915
    %vm922 = vmor %vm920, %vm921
    %v923 = vsel %vm922, %v915, %v919
    %v924 = vand.u32 2147483647, %v914
    %vm925 = vcmp.eq.f32.partialorder %v924, 8.507059e+37
    %v926 = vand.u32 %v914, 2147483648
    %v927 = vor.u32 1.1754944e-38, %v926
    %v928 = vsel %vm925, %v927, %v923
    %v929 = vmul.f32 1.0, %v928
    %v930 = vxor.u32 %v908, 2147483648
    %v931 = vmul.f32 %v930, 1.442695
    %v932 = vpow.pop %v931
    %v933 = vadd.f32 %v932, 1.0
    %v934 = vrcp.pop %v933
    %v935 = vmul.f32 %v933, %v934
    %v936 = vsub.f32 1.0, %v935
    %v937 = vmul.f32 %v934, %v936
    %v938 = vadd.f32 %v934, %v937
    %vm939 = vweird.f32 %v933
    %vm940 = vweird.f32 %v934
    %vm941 = vmor %vm939, %vm940
    %v942 = vsel %vm941, %v934, %v938
    %v943 = vand.u32 2147483647, %v933
    %vm944 = vcmp.eq.f32.partialorder %v943, 8.507059e+37
    %v945 = vand.u32 %v933, 2147483648
    %v946 = vor.u32 1.1754944e-38, %v945
    %v947 = vsel %vm944, %v946, %v942
    %v948 = vmul.f32 1.0, %v947
    %v949 = vtanh.pop %v909
    %v950 = vxor.u32 %v910, 2147483648
    %v951 = vmul.f32 %v950, 1.442695
    %v952 = vpow.pop %v951
    %v953 = vadd.f32 %v952, 1.0
    %v954 = vrcp.pop %v953
    %v955 = vmul.f32 %v953, %v954
    %v956 = vsub.f32 1.0, %v955
    %v957 = vmul.f32 %v954, %v956
    %v958 = vadd.f32 %v954, %v957
    %vm959 = vweird.f32 %v953
    %vm960 = vweird.f32 %v954
    %vm961 = vmor %vm959, %vm960
    %v962 = vsel %vm961, %v954, %v958
    %v963 = vand.u32 2147483647, %v953
    %vm964 = vcmp.eq.f32.partialorder %v963, 8.507059e+37
    %v965 = vand.u32 %v953, 2147483648
    %v966 = vor.u32 1.1754944e-38, %v965
    %v967 = vsel %vm964, %v966, %v962
    %v968 = vmul.f32 1.0, %v967
    %v969 = vmul.f32 %v948, %v813
    %v970 = vmul.f32 %v929, %v949
    %v971 = vadd.f32 %v969, %v970
    %v972 = vtanh.pop %v971
    %v973 = vmul.f32 %v968, %v972
    %vm974 = vcmp.eq.s32.totalorder %v284, 4
    %v975 = vsel %vm974, 1, 0
    %976 = vset.pattern.permute.xlu0 0
    %977 = vperm.xlu0 %976, %v975
    %v978 = vpop.permute.xlu0 %977
    %vm979 = vcmp.eq.s32.totalorder %v978, 1
    %v980 = vsel %vm979, %v973, %v822
    %v981 = vld [vmem:[#allocation2 + $0x80] sm:$0xff]
    %v982 = vld [vmem:[#allocation2 + $0x88] sm:$0xff]
    %v983 = vld [vmem:[#allocation2 + $0x90] sm:$0xff]
    %v984 = vld [vmem:[#allocation2 + $0x98] sm:$0xff]
    %985 = vmatpush.msra.mxu0 %v349
    %986 = vmatpush.msra.mxu0 %v345
    %987 = vmatpush.msra.mxu0 %v341
    %988 = vmatpush.msra.mxu0 %v337
    %989 = vmatpush.msra.mxu0 %v333
    %990 = vmatpush.msra.mxu0 %v329
    %991 = vmatpush.msra.mxu0 %v325
    %992 = vmatpush.msra.mxu0 %v321
    %993 = vmatpush.msra.mxu0 %v317
    %994 = vmatpush.msra.mxu0 %v313
    %995 = vmatpush.msra.mxu0 %v309
    %996 = vmatpush.msra.mxu0 %v305
    %997 = vmatpush.msra.mxu0 %v301
    %998 = vmatpush.msra.mxu0 %v297
    %999 = vmatpush.msra.mxu0 %v293
    %1000 = vmatpush.msra.mxu0 %v289
    %1001 = vmatmul.f32.gmra.mxu0 %v973
    %v1002 = vpop.f32.mrf.mxu0
    %v1003 = vadd.f32 0.0, %v1002
    %1004 = vdwg.mxu0
    %1005 = vmatpush.msra.mxu0 %v350
    %1006 = vmatpush.msra.mxu0 %v346
    %1007 = vmatpush.msra.mxu0 %v342
    %1008 = vmatpush.msra.mxu0 %v338
    %1009 = vmatpush.msra.mxu0 %v334
    %1010 = vmatpush.msra.mxu0 %v330
    %1011 = vmatpush.msra.mxu0 %v326
    %1012 = vmatpush.msra.mxu0 %v322
    %1013 = vmatpush.msra.mxu0 %v318
    %1014 = vmatpush.msra.mxu0 %v314
    %1015 = vmatpush.msra.mxu0 %v310
    %1016 = vmatpush.msra.mxu0 %v306
    %1017 = vmatpush.msra.mxu0 %v302
    %1018 = vmatpush.msra.mxu0 %v298
    %1019 = vmatpush.msra.mxu0 %v294
    %1020 = vmatpush.msra.mxu0 %v290
    %1021 = vmatmul.f32.gmra.mxu0 %v973
    %v1022 = vpop.f32.mrf.mxu0
    %v1023 = vadd.f32 0.0, %v1022
    %1024 = vdwg.mxu0
    %1025 = vmatpush.msra.mxu0 %v351
    %1026 = vmatpush.msra.mxu0 %v347
    %1027 = vmatpush.msra.mxu0 %v343
    %1028 = vmatpush.msra.mxu0 %v339
    %1029 = vmatpush.msra.mxu0 %v335
    %1030 = vmatpush.msra.mxu0 %v331
    %1031 = vmatpush.msra.mxu0 %v327
    %1032 = vmatpush.msra.mxu0 %v323
    %1033 = vmatpush.msra.mxu0 %v319
    %1034 = vmatpush.msra.mxu0 %v315
    %1035 = vmatpush.msra.mxu0 %v311
    %1036 = vmatpush.msra.mxu0 %v307
    %1037 = vmatpush.msra.mxu0 %v303
    %1038 = vmatpush.msra.mxu0 %v299
    %1039 = vmatpush.msra.mxu0 %v295
    %1040 = vmatpush.msra.mxu0 %v291
    %1041 = vmatmul.f32.gmra.mxu0 %v973
    %v1042 = vpop.f32.mrf.mxu0
    %v1043 = vadd.f32 0.0, %v1042
    %1044 = vdwg.mxu0
    %1045 = vmatpush.msra.mxu0 %v352
    %1046 = vmatpush.msra.mxu0 %v348
    %1047 = vmatpush.msra.mxu0 %v344
    %1048 = vmatpush.msra.mxu0 %v340
    %1049 = vmatpush.msra.mxu0 %v336
    %1050 = vmatpush.msra.mxu0 %v332
    %1051 = vmatpush.msra.mxu0 %v328
    %1052 = vmatpush.msra.mxu0 %v324
    %1053 = vmatpush.msra.mxu0 %v320
    %1054 = vmatpush.msra.mxu0 %v316
    %1055 = vmatpush.msra.mxu0 %v312
    %1056 = vmatpush.msra.mxu0 %v308
    %1057 = vmatpush.msra.mxu0 %v304
    %1058 = vmatpush.msra.mxu0 %v300
    %1059 = vmatpush.msra.mxu0 %v296
    %1060 = vmatpush.msra.mxu0 %v292
    %1061 = vmatmul.f32.gmra.mxu0 %v973
    %v1062 = vpop.f32.mrf.mxu0
    %v1063 = vadd.f32 0.0, %v1062
    %1064 = vdwg.mxu0
    %v1065 = vadd.f32 %v981, %v1003
    %v1066 = vadd.f32 %v982, %v1023
    %v1067 = vadd.f32 %v983, %v1043
    %v1068 = vadd.f32 %v984, %v1063
    %v1069 = vxor.u32 %v1065, 2147483648
    %v1070 = vmul.f32 %v1069, 1.442695
    %v1071 = vpow.pop %v1070
    %v1072 = vadd.f32 %v1071, 1.0
    %v1073 = vrcp.pop %v1072
    %v1074 = vmul.f32 %v1072, %v1073
    %v1075 = vsub.f32 1.0, %v1074
    %v1076 = vmul.f32 %v1073, %v1075
    %v1077 = vadd.f32 %v1073, %v1076
    %vm1078 = vweird.f32 %v1072
    %vm1079 = vweird.f32 %v1073
    %vm1080 = vmor %vm1078, %vm1079
    %v1081 = vsel %vm1080, %v1073, %v1077
    %v1082 = vand.u32 2147483647, %v1072
    %vm1083 = vcmp.eq.f32.partialorder %v1082, 8.507059e+37
    %v1084 = vand.u32 %v1072, 2147483648
    %v1085 = vor.u32 1.1754944e-38, %v1084
    %v1086 = vsel %vm1083, %v1085, %v1081
    %v1087 = vmul.f32 1.0, %v1086
    %v1088 = vxor.u32 %v1066, 2147483648
    %v1089 = vmul.f32 %v1088, 1.442695
    %v1090 = vpow.pop %v1089
    %v1091 = vadd.f32 %v1090, 1.0
    %v1092 = vrcp.pop %v1091
    %v1093 = vmul.f32 %v1091, %v1092
    %v1094 = vsub.f32 1.0, %v1093
    %v1095 = vmul.f32 %v1092, %v1094
    %v1096 = vadd.f32 %v1092, %v1095
    %vm1097 = vweird.f32 %v1091
    %vm1098 = vweird.f32 %v1092
    %vm1099 = vmor %vm1097, %vm1098
    %v1100 = vsel %vm1099, %v1092, %v1096
    %v1101 = vand.u32 2147483647, %v1091
    %vm1102 = vcmp.eq.f32.partialorder %v1101, 8.507059e+37
    %v1103 = vand.u32 %v1091, 2147483648
    %v1104 = vor.u32 1.1754944e-38, %v1103
    %v1105 = vsel %vm1102, %v1104, %v1100
    %v1106 = vmul.f32 1.0, %v1105
    %v1107 = vtanh.pop %v1067
    %v1108 = vxor.u32 %v1068, 2147483648
    %v1109 = vmul.f32 %v1108, 1.442695
    %v1110 = vpow.pop %v1109
    %v1111 = vadd.f32 %v1110, 1.0
    %v1112 = vrcp.pop %v1111
    %v1113 = vmul.f32 %v1111, %v1112
    %v1114 = vsub.f32 1.0, %v1113
    %v1115 = vmul.f32 %v1112, %v1114
    %v1116 = vadd.f32 %v1112, %v1115
    %vm1117 = vweird.f32 %v1111
    %vm1118 = vweird.f32 %v1112
    %vm1119 = vmor %vm1117, %vm1118
    %v1120 = vsel %vm1119, %v1112, %v1116
    %v1121 = vand.u32 2147483647, %v1111
    %vm1122 = vcmp.eq.f32.partialorder %v1121, 8.507059e+37
    %v1123 = vand.u32 %v1111, 2147483648
    %v1124 = vor.u32 1.1754944e-38, %v1123
    %v1125 = vsel %vm1122, %v1124, %v1120
    %v1126 = vmul.f32 1.0, %v1125
    %v1127 = vmul.f32 %v1106, %v971
    %v1128 = vmul.f32 %v1087, %v1107
    %v1129 = vadd.f32 %v1127, %v1128
    %v1130 = vtanh.pop %v1129
    %v1131 = vmul.f32 %v1126, %v1130
    %vm1132 = vcmp.eq.s32.totalorder %v284, 5
    %v1133 = vsel %vm1132, 1, 0
    %1134 = vset.pattern.permute.xlu0 0
    %1135 = vperm.xlu0 %1134, %v1133
    %v1136 = vpop.permute.xlu0 %1135
    %vm1137 = vcmp.eq.s32.totalorder %v1136, 1
    %v1138 = vsel %vm1137, %v1131, %v980
    %v1139 = vld [vmem:[#allocation2 + $0xa0] sm:$0xff]
    %v1140 = vld [vmem:[#allocation2 + $0xa8] sm:$0xff]
    %v1141 = vld [vmem:[#allocation2 + $0xb0] sm:$0xff]
    %v1142 = vld [vmem:[#allocation2 + $0xb8] sm:$0xff]
    %1143 = vmatpush.msra.mxu0 %v349
    %1144 = vmatpush.msra.mxu0 %v345
    %1145 = vmatpush.msra.mxu0 %v341
    %1146 = vmatpush.msra.mxu0 %v337
    %1147 = vmatpush.msra.mxu0 %v333
    %1148 = vmatpush.msra.mxu0 %v329
    %1149 = vmatpush.msra.mxu0 %v325
    %1150 = vmatpush.msra.mxu0 %v321
    %1151 = vmatpush.msra.mxu0 %v317
    %1152 = vmatpush.msra.mxu0 %v313
    %1153 = vmatpush.msra.mxu0 %v309
    %1154 = vmatpush.msra.mxu0 %v305
    %1155 = vmatpush.msra.mxu0 %v301
    %1156 = vmatpush.msra.mxu0 %v297
    %1157 = vmatpush.msra.mxu0 %v293
    %1158 = vmatpush.msra.mxu0 %v289
    %1159 = vmatmul.f32.gmra.mxu0 %v1131
    %v1160 = vpop.f32.mrf.mxu0
    %v1161 = vadd.f32 0.0, %v1160
    %1162 = vdwg.mxu0
    %1163 = vmatpush.msra.mxu0 %v350
    %1164 = vmatpush.msra.mxu0 %v346
    %1165 = vmatpush.msra.mxu0 %v342
    %1166 = vmatpush.msra.mxu0 %v338
    %1167 = vmatpush.msra.mxu0 %v334
    %1168 = vmatpush.msra.mxu0 %v330
    %1169 = vmatpush.msra.mxu0 %v326
    %1170 = vmatpush.msra.mxu0 %v322
    %1171 = vmatpush.msra.mxu0 %v318
    %1172 = vmatpush.msra.mxu0 %v314
    %1173 = vmatpush.msra.mxu0 %v310
    %1174 = vmatpush.msra.mxu0 %v306
    %1175 = vmatpush.msra.mxu0 %v302
    %1176 = vmatpush.msra.mxu0 %v298
    %1177 = vmatpush.msra.mxu0 %v294
    %1178 = vmatpush.msra.mxu0 %v290
    %1179 = vmatmul.f32.gmra.mxu0 %v1131
    %v1180 = vpop.f32.mrf.mxu0
    %v1181 = vadd.f32 0.0, %v1180
    %1182 = vdwg.mxu0
    %1183 = vmatpush.msra.mxu0 %v351
    %1184 = vmatpush.msra.mxu0 %v347
    %1185 = vmatpush.msra.mxu0 %v343
    %1186 = vmatpush.msra.mxu0 %v339
    %1187 = vmatpush.msra.mxu0 %v335
    %1188 = vmatpush.msra.mxu0 %v331
    %1189 = vmatpush.msra.mxu0 %v327
    %1190 = vmatpush.msra.mxu0 %v323
    %1191 = vmatpush.msra.mxu0 %v319
    %1192 = vmatpush.msra.mxu0 %v315
    %1193 = vmatpush.msra.mxu0 %v311
    %1194 = vmatpush.msra.mxu0 %v307
    %1195 = vmatpush.msra.mxu0 %v303
    %1196 = vmatpush.msra.mxu0 %v299
    %1197 = vmatpush.msra.mxu0 %v295
    %1198 = vmatpush.msra.mxu0 %v291
    %1199 = vmatmul.f32.gmra.mxu0 %v1131
    %v1200 = vpop.f32.mrf.mxu0
    %v1201 = vadd.f32 0.0, %v1200
    %1202 = vdwg.mxu0
    %1203 = vmatpush.msra.mxu0 %v352
    %1204 = vmatpush.msra.mxu0 %v348
    %1205 = vmatpush.msra.mxu0 %v344
    %1206 = vmatpush.msra.mxu0 %v340
    %1207 = vmatpush.msra.mxu0 %v336
    %1208 = vmatpush.msra.mxu0 %v332
    %1209 = vmatpush.msra.mxu0 %v328
    %1210 = vmatpush.msra.mxu0 %v324
    %1211 = vmatpush.msra.mxu0 %v320
    %1212 = vmatpush.msra.mxu0 %v316
    %1213 = vmatpush.msra.mxu0 %v312
    %1214 = vmatpush.msra.mxu0 %v308
    %1215 = vmatpush.msra.mxu0 %v304
    %1216 = vmatpush.msra.mxu0 %v300
    %1217 = vmatpush.msra.mxu0 %v296
    %1218 = vmatpush.msra.mxu0 %v292
    %1219 = vmatmul.f32.gmra.mxu0 %v1131
    %v1220 = vpop.f32.mrf.mxu0
    %v1221 = vadd.f32 0.0, %v1220
    %1222 = vdwg.mxu0
    %v1223 = vadd.f32 %v1139, %v1161
    %v1224 = vadd.f32 %v1140, %v1181
    %v1225 = vadd.f32 %v1141, %v1201
    %v1226 = vadd.f32 %v1142, %v1221
    %v1227 = vxor.u32 %v1223, 2147483648
    %v1228 = vmul.f32 %v1227, 1.442695
    %v1229 = vpow.pop %v1228
    %v1230 = vadd.f32 %v1229, 1.0
    %v1231 = vrcp.pop %v1230
    %v1232 = vmul.f32 %v1230, %v1231
    %v1233 = vsub.f32 1.0, %v1232
    %v1234 = vmul.f32 %v1231, %v1233
    %v1235 = vadd.f32 %v1231, %v1234
    %vm1236 = vweird.f32 %v1230
    %vm1237 = vweird.f32 %v1231
    %vm1238 = vmor %vm1236, %vm1237
    %v1239 = vsel %vm1238, %v1231, %v1235
    %v1240 = vand.u32 2147483647, %v1230
    %vm1241 = vcmp.eq.f32.partialorder %v1240, 8.507059e+37
    %v1242 = vand.u32 %v1230, 2147483648
    %v1243 = vor.u32 1.1754944e-38, %v1242
    %v1244 = vsel %vm1241, %v1243, %v1239
    %v1245 = vmul.f32 1.0, %v1244
    %v1246 = vxor.u32 %v1224, 2147483648
    %v1247 = vmul.f32 %v1246, 1.442695
    %v1248 = vpow.pop %v1247
    %v1249 = vadd.f32 %v1248, 1.0
    %v1250 = vrcp.pop %v1249
    %v1251 = vmul.f32 %v1249, %v1250
    %v1252 = vsub.f32 1.0, %v1251
    %v1253 = vmul.f32 %v1250, %v1252
    %v1254 = vadd.f32 %v1250, %v1253
    %vm1255 = vweird.f32 %v1249
    %vm1256 = vweird.f32 %v1250
    %vm1257 = vmor %vm1255, %vm1256
    %v1258 = vsel %vm1257, %v1250, %v1254
    %v1259 = vand.u32 2147483647, %v1249
    %vm1260 = vcmp.eq.f32.partialorder %v1259, 8.507059e+37
    %v1261 = vand.u32 %v1249, 2147483648
    %v1262 = vor.u32 1.1754944e-38, %v1261
    %v1263 = vsel %vm1260, %v1262, %v1258
    %v1264 = vmul.f32 1.0, %v1263
    %v1265 = vtanh.pop %v1225
    %v1266 = vxor.u32 %v1226, 2147483648
    %v1267 = vmul.f32 %v1266, 1.442695
    %v1268 = vpow.pop %v1267
    %v1269 = vadd.f32 %v1268, 1.0
    %v1270 = vrcp.pop %v1269
    %v1271 = vmul.f32 %v1269, %v1270
    %v1272 = vsub.f32 1.0, %v1271
    %v1273 = vmul.f32 %v1270, %v1272
    %v1274 = vadd.f32 %v1270, %v1273
    %vm1275 = vweird.f32 %v1269
    %vm1276 = vweird.f32 %v1270
    %vm1277 = vmor %vm1275, %vm1276
    %v1278 = vsel %vm1277, %v1270, %v1274
    %v1279 = vand.u32 2147483647, %v1269
    %vm1280 = vcmp.eq.f32.partialorder %v1279, 8.507059e+37
    %v1281 = vand.u32 %v1269, 2147483648
    %v1282 = vor.u32 1.1754944e-38, %v1281
    %v1283 = vsel %vm1280, %v1282, %v1278
    %v1284 = vmul.f32 1.0, %v1283
    %v1285 = vmul.f32 %v1264, %v1129
    %v1286 = vmul.f32 %v1245, %v1265
    %v1287 = vadd.f32 %v1285, %v1286
    %v1288 = vtanh.pop %v1287
    %v1289 = vmul.f32 %v1284, %v1288
    %vm1290 = vcmp.eq.s32.totalorder %v284, 6
    %v1291 = vsel %vm1290, 1, 0
    %1292 = vset.pattern.permute.xlu0 0
    %1293 = vperm.xlu0 %1292, %v1291
    %v1294 = vpop.permute.xlu0 %1293
    %vm1295 = vcmp.eq.s32.totalorder %v1294, 1
    %v1296 = vsel %vm1295, %v1289, %v1138
    %v1297 = vld [vmem:[#allocation2 + $0xc0] sm:$0xff]
    %v1298 = vld [vmem:[#allocation2 + $0xc8] sm:$0xff]
    %v1299 = vld [vmem:[#allocation2 + $0xd0] sm:$0xff]
    %v1300 = vld [vmem:[#allocation2 + $0xd8] sm:$0xff]
    %1301 = vmatpush.msra.mxu0 %v349
    %1302 = vmatpush.msra.mxu0 %v345
    %1303 = vmatpush.msra.mxu0 %v341
    %1304 = vmatpush.msra.mxu0 %v337
    %1305 = vmatpush.msra.mxu0 %v333
    %1306 = vmatpush.msra.mxu0 %v329
    %1307 = vmatpush.msra.mxu0 %v325
    %1308 = vmatpush.msra.mxu0 %v321
    %1309 = vmatpush.msra.mxu0 %v317
    %1310 = vmatpush.msra.mxu0 %v313
    %1311 = vmatpush.msra.mxu0 %v309
    %1312 = vmatpush.msra.mxu0 %v305
    %1313 = vmatpush.msra.mxu0 %v301
    %1314 = vmatpush.msra.mxu0 %v297
    %1315 = vmatpush.msra.mxu0 %v293
    %1316 = vmatpush.msra.mxu0 %v289
    %1317 = vmatmul.f32.gmra.mxu0 %v1289
    %v1318 = vpop.f32.mrf.mxu0
    %v1319 = vadd.f32 0.0, %v1318
    %1320 = vdwg.mxu0
    %1321 = vmatpush.msra.mxu0 %v350
    %1322 = vmatpush.msra.mxu0 %v346
    %1323 = vmatpush.msra.mxu0 %v342
    %1324 = vmatpush.msra.mxu0 %v338
    %1325 = vmatpush.msra.mxu0 %v334
    %1326 = vmatpush.msra.mxu0 %v330
    %1327 = vmatpush.msra.mxu0 %v326
    %1328 = vmatpush.msra.mxu0 %v322
    %1329 = vmatpush.msra.mxu0 %v318
    %1330 = vmatpush.msra.mxu0 %v314
    %1331 = vmatpush.msra.mxu0 %v310
    %1332 = vmatpush.msra.mxu0 %v306
    %1333 = vmatpush.msra.mxu0 %v302
    %1334 = vmatpush.msra.mxu0 %v298
    %1335 = vmatpush.msra.mxu0 %v294
    %1336 = vmatpush.msra.mxu0 %v290
    %1337 = vmatmul.f32.gmra.mxu0 %v1289
    %v1338 = vpop.f32.mrf.mxu0
    %v1339 = vadd.f32 0.0, %v1338
    %1340 = vdwg.mxu0
    %1341 = vmatpush.msra.mxu0 %v351
    %1342 = vmatpush.msra.mxu0 %v347
    %1343 = vmatpush.msra.mxu0 %v343
    %1344 = vmatpush.msra.mxu0 %v339
    %1345 = vmatpush.msra.mxu0 %v335
    %1346 = vmatpush.msra.mxu0 %v331
    %1347 = vmatpush.msra.mxu0 %v327
    %1348 = vmatpush.msra.mxu0 %v323
    %1349 = vmatpush.msra.mxu0 %v319
    %1350 = vmatpush.msra.mxu0 %v315
    %1351 = vmatpush.msra.mxu0 %v311
    %1352 = vmatpush.msra.mxu0 %v307
    %1353 = vmatpush.msra.mxu0 %v303
    %1354 = vmatpush.msra.mxu0 %v299
    %1355 = vmatpush.msra.mxu0 %v295
    %1356 = vmatpush.msra.mxu0 %v291
    %1357 = vmatmul.f32.gmra.mxu0 %v1289
    %v1358 = vpop.f32.mrf.mxu0
    %v1359 = vadd.f32 0.0, %v1358
    %1360 = vdwg.mxu0
    %1361 = vmatpush.msra.mxu0 %v352
    %1362 = vmatpush.msra.mxu0 %v348
    %1363 = vmatpush.msra.mxu0 %v344
    %1364 = vmatpush.msra.mxu0 %v340
    %1365 = vmatpush.msra.mxu0 %v336
    %1366 = vmatpush.msra.mxu0 %v332
    %1367 = vmatpush.msra.mxu0 %v328
    %1368 = vmatpush.msra.mxu0 %v324
    %1369 = vmatpush.msra.mxu0 %v320
    %1370 = vmatpush.msra.mxu0 %v316
    %1371 = vmatpush.msra.mxu0 %v312
    %1372 = vmatpush.msra.mxu0 %v308
    %1373 = vmatpush.msra.mxu0 %v304
    %1374 = vmatpush.msra.mxu0 %v300
    %1375 = vmatpush.msra.mxu0 %v296
    %1376 = vmatpush.msra.mxu0 %v292
    %1377 = vmatmul.f32.gmra.mxu0 %v1289
    %v1378 = vpop.f32.mrf.mxu0
    %v1379 = vadd.f32 0.0, %v1378
    %1380 = vdwg.mxu0
    %v1381 = vadd.f32 %v1297, %v1319
    %v1382 = vadd.f32 %v1298, %v1339
    %v1383 = vadd.f32 %v1299, %v1359
    %v1384 = vadd.f32 %v1300, %v1379
    %v1385 = vxor.u32 %v1381, 2147483648
    %v1386 = vmul.f32 %v1385, 1.442695
    %v1387 = vpow.pop %v1386
    %v1388 = vadd.f32 %v1387, 1.0
    %v1389 = vrcp.pop %v1388
    %v1390 = vmul.f32 %v1388, %v1389
    %v1391 = vsub.f32 1.0, %v1390
    %v1392 = vmul.f32 %v1389, %v1391
    %v1393 = vadd.f32 %v1389, %v1392
    %vm1394 = vweird.f32 %v1388
    %vm1395 = vweird.f32 %v1389
    %vm1396 = vmor %vm1394, %vm1395
    %v1397 = vsel %vm1396, %v1389, %v1393
    %v1398 = vand.u32 2147483647, %v1388
    %vm1399 = vcmp.eq.f32.partialorder %v1398, 8.507059e+37
    %v1400 = vand.u32 %v1388, 2147483648
    %v1401 = vor.u32 1.1754944e-38, %v1400
    %v1402 = vsel %vm1399, %v1401, %v1397
    %v1403 = vmul.f32 1.0, %v1402
    %v1404 = vxor.u32 %v1382, 2147483648
    %v1405 = vmul.f32 %v1404, 1.442695
    %v1406 = vpow.pop %v1405
    %v1407 = vadd.f32 %v1406, 1.0
    %v1408 = vrcp.pop %v1407
    %v1409 = vmul.f32 %v1407, %v1408
    %v1410 = vsub.f32 1.0, %v1409
    %v1411 = vmul.f32 %v1408, %v1410
    %v1412 = vadd.f32 %v1408, %v1411
    %vm1413 = vweird.f32 %v1407
    %vm1414 = vweird.f32 %v1408
    %vm1415 = vmor %vm1413, %vm1414
    %v1416 = vsel %vm1415, %v1408, %v1412
    %v1417 = vand.u32 2147483647, %v1407
    %vm1418 = vcmp.eq.f32.partialorder %v1417, 8.507059e+37
    %v1419 = vand.u32 %v1407, 2147483648
    %v1420 = vor.u32 1.1754944e-38, %v1419
    %v1421 = vsel %vm1418, %v1420, %v1416
    %v1422 = vmul.f32 1.0, %v1421
    %v1423 = vtanh.pop %v1383
    %v1424 = vxor.u32 %v1384, 2147483648
    %v1425 = vmul.f32 %v1424, 1.442695
    %v1426 = vpow.pop %v1425
    %v1427 = vadd.f32 %v1426, 1.0
    %v1428 = vrcp.pop %v1427
    %v1429 = vmul.f32 %v1427, %v1428
    %v1430 = vsub.f32 1.0, %v1429
    %v1431 = vmul.f32 %v1428, %v1430
    %v1432 = vadd.f32 %v1428, %v1431
    %vm1433 = vweird.f32 %v1427
    %vm1434 = vweird.f32 %v1428
    %vm1435 = vmor %vm1433, %vm1434
    %v1436 = vsel %vm1435, %v1428, %v1432
    %v1437 = vand.u32 2147483647, %v1427
    %vm1438 = vcmp.eq.f32.partialorder %v1437, 8.507059e+37
    %v1439 = vand.u32 %v1427, 2147483648
    %v1440 = vor.u32 1.1754944e-38, %v1439
    %v1441 = vsel %vm1438, %v1440, %v1436
    %v1442 = vmul.f32 1.0, %v1441
    %v1443 = vmul.f32 %v1422, %v1287
    %v1444 = vmul.f32 %v1403, %v1423
    %v1445 = vadd.f32 %v1443, %v1444
    %v1446 = vtanh.pop %v1445
    %v1447 = vmul.f32 %v1442, %v1446
    %vm1448 = vcmp.eq.s32.totalorder %v284, 7
    %v1449 = vsel %vm1448, 1, 0
    %1450 = vset.pattern.permute.xlu0 0
    %1451 = vperm.xlu0 %1450, %v1449
    %v1452 = vpop.permute.xlu0 %1451
    %vm1453 = vcmp.eq.s32.totalorder %v1452, 1
    %v1454 = vsel %vm1453, %v1447, %v1296
    %v1455 = vld [vmem:[#allocation2 + $0xe0] sm:$0xff]
    %v1456 = vld [vmem:[#allocation2 + $0xe8] sm:$0xff]
    %v1457 = vld [vmem:[#allocation2 + $0xf0] sm:$0xff]
    %v1458 = vld [vmem:[#allocation2 + $0xf8] sm:$0xff]
    %1459 = vmatpush.msra.mxu0 %v349
    %1460 = vmatpush.msra.mxu0 %v345
    %1461 = vmatpush.msra.mxu0 %v341
    %1462 = vmatpush.msra.mxu0 %v337
    %1463 = vmatpush.msra.mxu0 %v333
    %1464 = vmatpush.msra.mxu0 %v329
    %1465 = vmatpush.msra.mxu0 %v325
    %1466 = vmatpush.msra.mxu0 %v321
    %1467 = vmatpush.msra.mxu0 %v317
    %1468 = vmatpush.msra.mxu0 %v313
    %1469 = vmatpush.msra.mxu0 %v309
    %1470 = vmatpush.msra.mxu0 %v305
    %1471 = vmatpush.msra.mxu0 %v301
    %1472 = vmatpush.msra.mxu0 %v297
    %1473 = vmatpush.msra.mxu0 %v293
    %1474 = vmatpush.msra.mxu0 %v289
    %1475 = vmatmul.f32.gmra.mxu0 %v1447
    %v1476 = vpop.f32.mrf.mxu0
    %v1477 = vadd.f32 0.0, %v1476
    %1478 = vdwg.mxu0
    %1479 = vmatpush.msra.mxu0 %v350
    %1480 = vmatpush.msra.mxu0 %v346
    %1481 = vmatpush.msra.mxu0 %v342
    %1482 = vmatpush.msra.mxu0 %v338
    %1483 = vmatpush.msra.mxu0 %v334
    %1484 = vmatpush.msra.mxu0 %v330
    %1485 = vmatpush.msra.mxu0 %v326
    %1486 = vmatpush.msra.mxu0 %v322
    %1487 = vmatpush.msra.mxu0 %v318
    %1488 = vmatpush.msra.mxu0 %v314
    %1489 = vmatpush.msra.mxu0 %v310
    %1490 = vmatpush.msra.mxu0 %v306
    %1491 = vmatpush.msra.mxu0 %v302
    %1492 = vmatpush.msra.mxu0 %v298
    %1493 = vmatpush.msra.mxu0 %v294
    %1494 = vmatpush.msra.mxu0 %v290
    %1495 = vmatmul.f32.gmra.mxu0 %v1447
    %v1496 = vpop.f32.mrf.mxu0
    %v1497 = vadd.f32 0.0, %v1496
    %1498 = vdwg.mxu0
    %1499 = vmatpush.msra.mxu0 %v351
    %1500 = vmatpush.msra.mxu0 %v347
    %1501 = vmatpush.msra.mxu0 %v343
    %1502 = vmatpush.msra.mxu0 %v339
    %1503 = vmatpush.msra.mxu0 %v335
    %1504 = vmatpush.msra.mxu0 %v331
    %1505 = vmatpush.msra.mxu0 %v327
    %1506 = vmatpush.msra.mxu0 %v323
    %1507 = vmatpush.msra.mxu0 %v319
    %1508 = vmatpush.msra.mxu0 %v315
    %1509 = vmatpush.msra.mxu0 %v311
    %1510 = vmatpush.msra.mxu0 %v307
    %1511 = vmatpush.msra.mxu0 %v303
    %1512 = vmatpush.msra.mxu0 %v299
    %1513 = vmatpush.msra.mxu0 %v295
    %1514 = vmatpush.msra.mxu0 %v291
    %1515 = vmatmul.f32.gmra.mxu0 %v1447
    %v1516 = vpop.f32.mrf.mxu0
    %v1517 = vadd.f32 0.0, %v1516
    %1518 = vdwg.mxu0
    %1519 = vmatpush.msra.mxu0 %v352
    %1520 = vmatpush.msra.mxu0 %v348
    %1521 = vmatpush.msra.mxu0 %v344
    %1522 = vmatpush.msra.mxu0 %v340
    %1523 = vmatpush.msra.mxu0 %v336
    %1524 = vmatpush.msra.mxu0 %v332
    %1525 = vmatpush.msra.mxu0 %v328
    %1526 = vmatpush.msra.mxu0 %v324
    %1527 = vmatpush.msra.mxu0 %v320
    %1528 = vmatpush.msra.mxu0 %v316
    %1529 = vmatpush.msra.mxu0 %v312
    %1530 = vmatpush.msra.mxu0 %v308
    %1531 = vmatpush.msra.mxu0 %v304
    %1532 = vmatpush.msra.mxu0 %v300
    %1533 = vmatpush.msra.mxu0 %v296
    %1534 = vmatpush.msra.mxu0 %v292
    %1535 = vmatmul.f32.gmra.mxu0 %v1447
    %v1536 = vpop.f32.mrf.mxu0
    %v1537 = vadd.f32 0.0, %v1536
    %1538 = vdwg.mxu0
    %v1539 = vadd.f32 %v1455, %v1477
    %v1540 = vadd.f32 %v1456, %v1497
    %v1541 = vadd.f32 %v1457, %v1517
    %v1542 = vadd.f32 %v1458, %v1537
    %v1543 = vxor.u32 %v1539, 2147483648
    %v1544 = vmul.f32 %v1543, 1.442695
    %v1545 = vpow.pop %v1544
    %v1546 = vadd.f32 %v1545, 1.0
    %v1547 = vrcp.pop %v1546
    %v1548 = vmul.f32 %v1546, %v1547
    %v1549 = vsub.f32 1.0, %v1548
    %v1550 = vmul.f32 %v1547, %v1549
    %v1551 = vadd.f32 %v1547, %v1550
    %vm1552 = vweird.f32 %v1546
    %vm1553 = vweird.f32 %v1547
    %vm1554 = vmor %vm1552, %vm1553
    %v1555 = vsel %vm1554, %v1547, %v1551
    %v1556 = vand.u32 2147483647, %v1546
    %vm1557 = vcmp.eq.f32.partialorder %v1556, 8.507059e+37
    %v1558 = vand.u32 %v1546, 2147483648
    %v1559 = vor.u32 1.1754944e-38, %v1558
    %v1560 = vsel %vm1557, %v1559, %v1555
    %v1561 = vmul.f32 1.0, %v1560
    %v1562 = vxor.u32 %v1540, 2147483648
    %v1563 = vmul.f32 %v1562, 1.442695
    %v1564 = vpow.pop %v1563
    %v1565 = vadd.f32 %v1564, 1.0
    %v1566 = vrcp.pop %v1565
    %v1567 = vmul.f32 %v1565, %v1566
    %v1568 = vsub.f32 1.0, %v1567
    %v1569 = vmul.f32 %v1566, %v1568
    %v1570 = vadd.f32 %v1566, %v1569
    %vm1571 = vweird.f32 %v1565
    %vm1572 = vweird.f32 %v1566
    %vm1573 = vmor %vm1571, %vm1572
    %v1574 = vsel %vm1573, %v1566, %v1570
    %v1575 = vand.u32 2147483647, %v1565
    %vm1576 = vcmp.eq.f32.partialorder %v1575, 8.507059e+37
    %v1577 = vand.u32 %v1565, 2147483648
    %v1578 = vor.u32 1.1754944e-38, %v1577
    %v1579 = vsel %vm1576, %v1578, %v1574
    %v1580 = vmul.f32 1.0, %v1579
    %v1581 = vtanh.pop %v1541
    %v1582 = vxor.u32 %v1542, 2147483648
    %v1583 = vmul.f32 %v1582, 1.442695
    %v1584 = vpow.pop %v1583
    %v1585 = vadd.f32 %v1584, 1.0
    %v1586 = vrcp.pop %v1585
    %v1587 = vmul.f32 %v1585, %v1586
    %v1588 = vsub.f32 1.0, %v1587
    %v1589 = vmul.f32 %v1586, %v1588
    %v1590 = vadd.f32 %v1586, %v1589
    %vm1591 = vweird.f32 %v1585
    %vm1592 = vweird.f32 %v1586
    %vm1593 = vmor %vm1591, %vm1592
    %v1594 = vsel %vm1593, %v1586, %v1590
    %v1595 = vand.u32 2147483647, %v1585
    %vm1596 = vcmp.eq.f32.partialorder %v1595, 8.507059e+37
    %v1597 = vand.u32 %v1585, 2147483648
    %v1598 = vor.u32 1.1754944e-38, %v1597
    %v1599 = vsel %vm1596, %v1598, %v1594
    %v1600 = vmul.f32 1.0, %v1599
    %v1601 = vmul.f32 %v1580, %v1445
    %v1602 = vmul.f32 %v1561, %v1581
    %v1603 = vadd.f32 %v1601, %v1602
    %v1604 = vtanh.pop %v1603
    %v1605 = vmul.f32 %v1600, %v1604
    %vm1606 = vcmp.eq.s32.totalorder %v284, 8
    %v1607 = vsel %vm1606, 1, 0
    %1608 = vset.pattern.permute.xlu0 0
    %1609 = vperm.xlu0 %1608, %v1607
    %v1610 = vpop.permute.xlu0 %1609
    %vm1611 = vcmp.eq.s32.totalorder %v1610, 1
    %v1612 = vsel %vm1611, %v1605, %v1454
    %1613 = vst [vmem:[#allocation6] sm:$0xff] %v1612
    // Predicated region
    $region26: #{tpu_custom_call.1} parent=1 // pred_check
      _
    $region27: #{tpu_custom_call.1} parent=1 // pred_check_branch
      %1615 = sbr.rel (0) target = $region29
    $region28: #{tpu_custom_call.1} parent=1 // pred_region
      %1617 = vsyncadd [#allocation5], 0
      %s1619 = sshll.u32 [#allocation6], 4
      %s1620 = int_to_ptr.vmem [resolvable:$true] %s1619
      %s1621 = sshll.u32 %s5, 4
      %s1622 = int_to_ptr.hbm [resolvable:$true] %s1621
      %1624 = dma.vmem_to_hbm [thread:$0]  %s1620, 128, %s1622, [#allocation5]
    $region29: #{tpu_custom_call.1} parent=1 // pred_fallthru
      _
    // Predicated region
    $region30: #{tpu_custom_call.1} parent=1 // pred_check
      _
    $region31: #{tpu_custom_call.1} parent=1 // pred_check_branch
      %1626 = sbr.rel (0) target = $region33
    $region32: #{tpu_custom_call.1} parent=1 // pred_region
      %1628 = dma.done [#allocation5], 128
    $region33: #{tpu_custom_call.1} parent=1 // pred_fallthru
      _
    %1629 = vsyncpa [#allocation4], 1
    %1630 = vsyncpa [#allocation5], 1

</llo_original>
